<compile_context>
chip_gen: v7x
topology: tpu7x:2x2x1
jax: 0.10.0
libtpu: 0.0.40
codegen_flags: <defaults>
</compile_context>

<pallas_src>
import functools

import jax
import jax.numpy as jnp
from jax.experimental import pallas as pl
from jax.experimental.pallas import tpu as pltpu


# ----------------------------- model configuration ----------------------------- #

FEATURES = [("feat_a", 24), ("feat_b", 40), ("feat_c", 16)]   # (name, raw dim)
FEATURE_DIM = 16                                              # config['feature_dim']
FEATURE_NUM = len(FEATURES)                                   # config['feature_num']
INPUT_DIM = FEATURE_NUM * FEATURE_DIM                         # config['input_dim'] = 48
TOTAL_RAW_DIM = sum(d for _, d in FEATURES)                   # 80
DNN_HIDDEN = [64, 32]                                         # DNN layer widths
OUTPUT_DIM = DNN_HIDDEN[-1]                                   # config['output_dim'] = 32


# --------------------------------- Pallas kernel -------------------------------- #

def _dnn_kernel(n_dnn, *refs):
    """Fused forward pass for one batch tile.

    refs layout (inputs then outputs):
      x_ref                         concatenated raw features      [tb, TOTAL_RAW_DIM] (bf16 or f32)
      wf_ref, bf_ref                fused block-diag projection    [TOTAL_RAW_DIM, INPUT_DIM], [1, INPUT_DIM]
      wd_0, bd_0, ...               DNN layers (f32)
      w_lin, b_lin                  final Linear stored as [1, OUTPUT_DIM], [1, 1]
      out_ref                       lane-dense output row          [1, tb] (f32)
    """
    x_ref, wf_ref, bf_ref = refs[0], refs[1], refs[2]
    idx = 3
    dw, db = [], []
    for _ in range(n_dnn):
        dw.append(refs[idx]); db.append(refs[idx + 1]); idx += 2
    w_lin = refs[idx]; b_lin = refs[idx + 1]
    out_ref = refs[idx + 2]

    # 1) fused per-feature dimension reduction: one matmul against the
    #    block-diagonal weight (== per-feature Linear layers + concat).
    #    Inputs may be bf16; accumulation is f32; bias add in f32.
    h = jnp.dot(x_ref[...], wf_ref[...],
                preferred_element_type=jnp.float32) + bf_ref[...]     # [tb, INPUT_DIM] f32

    # 2) DNN MLP (ReLU between hidden layers, none on the last layer)
    for k in range(n_dnn):
        h = jnp.dot(h, dw[k][...], preferred_element_type=jnp.float32) + db[k][...]
        if k < n_dnn - 1:
            h = jnp.maximum(h, 0.0)

    # 3) explicit ReLU from the module, final Linear to 1, Sigmoid.
    #    Compute the final layer in (1, tb) orientation so the store is lane-dense.
    h = jnp.maximum(h, 0.0)
    h_t = h.T                                                         # [OUTPUT_DIM, tb]
    logit = jnp.dot(w_lin[...], h_t,
                    preferred_element_type=jnp.float32) + b_lin[...]  # [1, tb]
    # sigmoid via EUP exp + approximate EUP reciprocal (free slots)
    out_ref[...] = pl.reciprocal(1.0 + jnp.exp(-logit), approx=True)


# --------------------------------- wrapper -------------------------------------- #

def _full_spec(a):
    nd = a.ndim
    return pl.BlockSpec(a.shape, lambda b, _nd=nd: (0,) * _nd)


def dnn_model_forward(features_x, params, *, tb=256, use_bf16=True):
    """features_x: list of [B, dim_i] arrays. Returns [B, 1] sigmoid output (f32)."""
    B = features_x[0].shape[0]
    n_dnn = len(params["dnn_w"])

    # Host-side prep: concat raw features once (replaces the in-kernel concat) and
    # pad the batch to a multiple of the batch tile.
    x_cat = jnp.concatenate([x.astype(jnp.float32) for x in features_x], axis=-1)
    b_pad = pl.cdiv(B, tb) * tb
    if b_pad != B:
        x_cat = jnp.pad(x_cat, ((0, b_pad - B), (0, 0)))

    w_feat = params["feat_w_fused"]
    b_feat = params["feat_b_fused"]
    if use_bf16:
        # halve the HBM activation stream; accumulation stays f32 in-kernel
        x_cat = x_cat.astype(jnp.bfloat16)
        w_feat = w_feat.astype(jnp.bfloat16)

    total_in = x_cat.shape[1]
    args = [x_cat, w_feat, b_feat]
    in_specs = [
        pl.BlockSpec((tb, total_in), lambda b: (b, 0)),
        _full_spec(w_feat),
        _full_spec(b_feat),
    ]
    for w, bvec in zip(params["dnn_w"], params["dnn_b"]):
        args += [w, bvec]
        in_specs += [_full_spec(w), _full_spec(bvec)]
    args += [params["lin_w"], params["lin_b"]]
    in_specs += [_full_spec(params["lin_w"]), _full_spec(params["lin_b"])]

    kernel = functools.partial(_dnn_kernel, n_dnn)

    # Lane-dense output: one (1, tb) row per grid step into a (1, B_pad) buffer.
    out_row = pl.pallas_call(
        kernel,
        out_shape=jax.ShapeDtypeStruct((1, b_pad), jnp.float32),
        grid_spec=pltpu.PrefetchScalarGridSpec(
            num_scalar_prefetch=0,
            grid=(b_pad // tb,),
            in_specs=in_specs,
            out_specs=pl.BlockSpec((1, tb), lambda b: (0, b)),
        ),
        compiler_params=pltpu.CompilerParams(
            dimension_semantics=("parallel",),
        ),
    )(*args)

    return out_row[0, :B].reshape(B, 1)


# --------------------------- deterministic parameter init ----------------------- #

def init_params(key):
    keys = jax.random.split(key, 64)
    ki = iter(range(64))

    def linear(in_dim, out_dim):
        # weights stored [in, out] (transposed relative to torch's [out, in])
        bound = 1.0 / jnp.sqrt(in_dim)
        w = jax.random.uniform(keys[next(ki)], (in_dim, out_dim),
                               minval=-bound, maxval=bound, dtype=jnp.float32)
        b = jax.random.uniform(keys[next(ki)], (1, out_dim),
                               minval=-bound, maxval=bound, dtype=jnp.float32)
        return w, b

    feat_w, feat_b = [], []
    for _, dim in FEATURES:
        w, b = linear(dim, FEATURE_DIM)
        feat_w.append(w)
        feat_b.append(b)

    # Fuse the per-feature projections into one block-diagonal weight + one bias.
    w_fused = jnp.zeros((TOTAL_RAW_DIM, INPUT_DIM), jnp.float32)
    row = 0
    for i, (_, dim) in enumerate(FEATURES):
        w_fused = w_fused.at[row:row + dim,
                             i * FEATURE_DIM:(i + 1) * FEATURE_DIM].set(feat_w[i])
        row += dim
    b_fused = jnp.concatenate(feat_b, axis=-1)                      # [1, INPUT_DIM]

    params = {
        "feat_w_fused": w_fused,
        "feat_b_fused": b_fused,
        "dnn_w": [],
        "dnn_b": [],
    }
    prev = INPUT_DIM
    for h in DNN_HIDDEN:
        w, b = linear(prev, h)
        params["dnn_w"].append(w)
        params["dnn_b"].append(b)
        prev = h

    w_lin, b_lin = linear(OUTPUT_DIM, 1)
    params["lin_w"] = w_lin.T          # stored [1, OUTPUT_DIM] for the (1, tb) epilogue
    params["lin_b"] = b_lin            # [1, 1]
    return params


# ------------------------------- pure-JAX reference ------------------------------ #

def ref_forward(features_x, params, use_bf16):
    x_cat = jnp.concatenate([x.astype(jnp.float32) for x in features_x], axis=-1)
    wf = params["feat_w_fused"]
    if use_bf16:
        x_cat = x_cat.astype(jnp.bfloat16)
        wf = wf.astype(jnp.bfloat16)
    h = jnp.dot(x_cat, wf, preferred_element_type=jnp.float32) + params["feat_b_fused"]
    for k in range(len(params["dnn_w"])):
        h = jnp.dot(h, params["dnn_w"][k],
                    preferred_element_type=jnp.float32) + params["dnn_b"][k]
        if k < len(params["dnn_w"]) - 1:
            h = jnp.maximum(h, 0.0)
    h = jnp.maximum(h, 0.0)
    logit = jnp.dot(h, params["lin_w"].T,
                    preferred_element_type=jnp.float32) + params["lin_b"]
    return jax.nn.sigmoid(logit)


# ------------------------------------ main --------------------------------------- #

if __name__ == "__main__":
    key = jax.random.PRNGKey(0)
    pkey, *xkeys = jax.random.split(key, 1 + FEATURE_NUM)

    B = 512          # grid of 2 tiles at tb=256 (keeps both v7x TensorCores busy)
    TB = 256
    features_x = [
        jax.random.normal(xkeys[i], (B, dim), dtype=jnp.float32)
        for i, (_, dim) in enumerate(FEATURES)
    ]
    params = init_params(pkey)

    out = dnn_model_forward(features_x, params, tb=TB, use_bf16=True)
    out = jax.block_until_ready(out)

    ref = ref_forward(features_x, params, use_bf16=True)

    assert out.shape == (B, 1)
    assert bool(jnp.all(jnp.isfinite(out)))
    max_err = float(jnp.max(jnp.abs(out - ref)))
    assert max_err < 5e-3, f"max abs error {max_err}"

    # TODO(synk): BCELoss (`loss` method) is training-time and not part of the fused
    # forward kernel.

    print("KERNEL_OK")
</pallas_src>

<mosaic_0001>
module attributes {stable_mosaic.version = 11 : i64} {
  func.func @_dnn_kernel(%arg0: i32, %arg1: memref<256x80xbf16, #tpu.memory_space<vmem>>, %arg2: memref<80x48xbf16, #tpu.memory_space<vmem>>, %arg3: memref<1x48xf32, #tpu.memory_space<vmem>>, %arg4: memref<48x64xf32, #tpu.memory_space<vmem>>, %arg5: memref<1x64xf32, #tpu.memory_space<vmem>>, %arg6: memref<64x32xf32, #tpu.memory_space<vmem>>, %arg7: memref<1x32xf32, #tpu.memory_space<vmem>>, %arg8: memref<1x32xf32, #tpu.memory_space<vmem>>, %arg9: memref<1x1xf32, #tpu.memory_space<vmem>>, %arg10: memref<1x256xf32, #tpu.memory_space<vmem>>) attributes {dimension_semantics = [#tpu.dimension_semantics<parallel>], iteration_bounds = array<i64: 2>, scalar_prefetch = 0 : i64, scratch_operands = 0 : i64, tpu.core_type = #tpu.core_type<tc>, window_params = [{transform_indices = @transform_0, window_bounds = array<i64: 256, 80>}, {pipeline_mode = #tpu.pipeline_mode<synchronous>, transform_indices = @transform_1, window_bounds = array<i64: 80, 48>}, {pipeline_mode = #tpu.pipeline_mode<synchronous>, transform_indices = @transform_2, window_bounds = array<i64: 1, 48>}, {pipeline_mode = #tpu.pipeline_mode<synchronous>, transform_indices = @transform_3, window_bounds = array<i64: 48, 64>}, {pipeline_mode = #tpu.pipeline_mode<synchronous>, transform_indices = @transform_4, window_bounds = array<i64: 1, 64>}, {pipeline_mode = #tpu.pipeline_mode<synchronous>, transform_indices = @transform_5, window_bounds = array<i64: 64, 32>}, {pipeline_mode = #tpu.pipeline_mode<synchronous>, transform_indices = @transform_6, window_bounds = array<i64: 1, 32>}, {pipeline_mode = #tpu.pipeline_mode<synchronous>, transform_indices = @transform_7, window_bounds = array<i64: 1, 32>}, {pipeline_mode = #tpu.pipeline_mode<synchronous>, transform_indices = @transform_8, window_bounds = array<i64: 1, 1>}, {transform_indices = @transform_9, window_bounds = array<i64: 1, 256>}]} {
    %c0 = arith.constant 0 : index
    %c0_0 = arith.constant 0 : index
    %0 = vector.load %arg1[%c0, %c0_0] : memref<256x80xbf16, #tpu.memory_space<vmem>>, vector<256x80xbf16>
    %c0_1 = arith.constant 0 : index
    %c0_2 = arith.constant 0 : index
    %1 = vector.load %arg2[%c0_1, %c0_2] : memref<80x48xbf16, #tpu.memory_space<vmem>>, vector<80x48xbf16>
    %cst = arith.constant dense<0.000000e+00> : vector<256x48xf32>
    %2 = tpu.matmul %0, %1, %cst {dimension_numbers = #tpu.dot_dimension_numbers<[1], [0], [0], [1], [0, 0, 1, 1], [], []>} : vector<256x80xbf16>, vector<80x48xbf16>, vector<256x48xf32> -> vector<256x48xf32>
    %c0_3 = arith.constant 0 : index
    %c0_4 = arith.constant 0 : index
    %3 = vector.load %arg3[%c0_3, %c0_4] : memref<1x48xf32, #tpu.memory_space<vmem>>, vector<1x48xf32>
    %4 = vector.broadcast %3 : vector<1x48xf32> to vector<256x48xf32>
    %5 = arith.addf %2, %4 : vector<256x48xf32>
    %c0_5 = arith.constant 0 : index
    %c0_6 = arith.constant 0 : index
    %6 = vector.load %arg4[%c0_5, %c0_6] : memref<48x64xf32, #tpu.memory_space<vmem>>, vector<48x64xf32>
    %cst_7 = arith.constant dense<0.000000e+00> : vector<256x64xf32>
    %7 = tpu.matmul %5, %6, %cst_7 {dimension_numbers = #tpu.dot_dimension_numbers<[1], [0], [0], [1], [0, 0, 1, 1], [], []>} : vector<256x48xf32>, vector<48x64xf32>, vector<256x64xf32> -> vector<256x64xf32>
    %c0_8 = arith.constant 0 : index
    %c0_9 = arith.constant 0 : index
    %8 = vector.load %arg5[%c0_8, %c0_9] : memref<1x64xf32, #tpu.memory_space<vmem>>, vector<1x64xf32>
    %9 = vector.broadcast %8 : vector<1x64xf32> to vector<256x64xf32>
    %10 = arith.addf %7, %9 : vector<256x64xf32>
    %cst_10 = arith.constant 0.000000e+00 : f32
    %11 = vector.broadcast %cst_10 : f32 to vector<256x64xf32>
    %12 = arith.maximumf %10, %11 : vector<256x64xf32>
    %c0_11 = arith.constant 0 : index
    %c0_12 = arith.constant 0 : index
    %13 = vector.load %arg6[%c0_11, %c0_12] : memref<64x32xf32, #tpu.memory_space<vmem>>, vector<64x32xf32>
    %cst_13 = arith.constant dense<0.000000e+00> : vector<256x32xf32>
    %14 = tpu.matmul %12, %13, %cst_13 {dimension_numbers = #tpu.dot_dimension_numbers<[1], [0], [0], [1], [0, 0, 1, 1], [], []>} : vector<256x64xf32>, vector<64x32xf32>, vector<256x32xf32> -> vector<256x32xf32>
    %c0_14 = arith.constant 0 : index
    %c0_15 = arith.constant 0 : index
    %15 = vector.load %arg7[%c0_14, %c0_15] : memref<1x32xf32, #tpu.memory_space<vmem>>, vector<1x32xf32>
    %16 = vector.broadcast %15 : vector<1x32xf32> to vector<256x32xf32>
    %17 = arith.addf %14, %16 : vector<256x32xf32>
    %cst_16 = arith.constant 0.000000e+00 : f32
    %18 = vector.broadcast %cst_16 : f32 to vector<256x32xf32>
    %19 = arith.maximumf %17, %18 : vector<256x32xf32>
    %20 = tpu.transpose %19, [1, 0] : vector<256x32xf32> -> vector<32x256xf32>
    %c0_17 = arith.constant 0 : index
    %c0_18 = arith.constant 0 : index
    %21 = vector.load %arg8[%c0_17, %c0_18] : memref<1x32xf32, #tpu.memory_space<vmem>>, vector<1x32xf32>
    %cst_19 = arith.constant dense<0.000000e+00> : vector<1x256xf32>
    %22 = tpu.matmul %21, %20, %cst_19 {dimension_numbers = #tpu.dot_dimension_numbers<[1], [0], [0], [1], [0, 0, 1, 1], [], []>} : vector<1x32xf32>, vector<32x256xf32>, vector<1x256xf32> -> vector<1x256xf32>
    %c0_20 = arith.constant 0 : index
    %c0_21 = arith.constant 0 : index
    %23 = vector.load %arg9[%c0_20, %c0_21] : memref<1x1xf32, #tpu.memory_space<vmem>>, vector<1x1xf32>
    %24 = vector.broadcast %23 : vector<1x1xf32> to vector<1x256xf32>
    %25 = arith.addf %22, %24 : vector<1x256xf32>
    %cst_22 = arith.constant 0.000000e+00 : f32
    %26 = vector.broadcast %cst_22 : f32 to vector<1x256xf32>
    %27 = arith.subf %26, %25 : vector<1x256xf32>
    %28 = math.exp %27 : vector<1x256xf32>
    %cst_23 = arith.constant 1.000000e+00 : f32
    %29 = vector.broadcast %cst_23 : f32 to vector<1x256xf32>
    %30 = arith.addf %29, %28 : vector<1x256xf32>
    %31 = tpu.reciprocal %30 {approx = true} : vector<1x256xf32> -> vector<1x256xf32>
    %c0_24 = arith.constant 0 : index
    %c0_25 = arith.constant 0 : index
    %32 = vector.load %arg10[%c0_24, %c0_25] : memref<1x256xf32, #tpu.memory_space<vmem>>, vector<1x256xf32>
    tpu.vector_store %arg10[%c0_24, %c0_25], %31 {strides = array<i32>} : memref<1x256xf32, #tpu.memory_space<vmem>>, vector<1x256xf32>,
    return
  }
  func.func @transform_0(%arg0: i32) -> (i32, i32) {
    %c0_i32 = arith.constant 0 : i32
    %c0_i32_0 = arith.constant 0 : i32
    return %arg0, %c0_i32 : i32, i32
  }
  func.func @transform_1(%arg0: i32) -> (i32, i32) {
    %c0_i32 = arith.constant 0 : i32
    %c0_i32_0 = arith.constant 0 : i32
    %c0_i32_1 = arith.constant 0 : i32
    return %c0_i32, %c0_i32_0 : i32, i32
  }
  func.func @transform_2(%arg0: i32) -> (i32, i32) {
    %c0_i32 = arith.constant 0 : i32
    %c0_i32_0 = arith.constant 0 : i32
    %c0_i32_1 = arith.constant 0 : i32
    return %c0_i32, %c0_i32_0 : i32, i32
  }
  func.func @transform_3(%arg0: i32) -> (i32, i32) {
    %c0_i32 = arith.constant 0 : i32
    %c0_i32_0 = arith.constant 0 : i32
    %c0_i32_1 = arith.constant 0 : i32
    return %c0_i32, %c0_i32_0 : i32, i32
  }
  func.func @transform_4(%arg0: i32) -> (i32, i32) {
    %c0_i32 = arith.constant 0 : i32
    %c0_i32_0 = arith.constant 0 : i32
    %c0_i32_1 = arith.constant 0 : i32
    return %c0_i32, %c0_i32_0 : i32, i32
  }
  func.func @transform_5(%arg0: i32) -> (i32, i32) {
    %c0_i32 = arith.constant 0 : i32
    %c0_i32_0 = arith.constant 0 : i32
    %c0_i32_1 = arith.constant 0 : i32
    return %c0_i32, %c0_i32_0 : i32, i32
  }
  func.func @transform_6(%arg0: i32) -> (i32, i32) {
    %c0_i32 = arith.constant 0 : i32
    %c0_i32_0 = arith.constant 0 : i32
    %c0_i32_1 = arith.constant 0 : i32
    return %c0_i32, %c0_i32_0 : i32, i32
  }
  func.func @transform_7(%arg0: i32) -> (i32, i32) {
    %c0_i32 = arith.constant 0 : i32
    %c0_i32_0 = arith.constant 0 : i32
    %c0_i32_1 = arith.constant 0 : i32
    return %c0_i32, %c0_i32_0 : i32, i32
  }
  func.func @transform_8(%arg0: i32) -> (i32, i32) {
    %c0_i32 = arith.constant 0 : i32
    %c0_i32_0 = arith.constant 0 : i32
    %c0_i32_1 = arith.constant 0 : i32
    return %c0_i32, %c0_i32_0 : i32, i32
  }
  func.func @transform_9(%arg0: i32) -> (i32, i32) {
    %c0_i32 = arith.constant 0 : i32
    %c0_i32_0 = arith.constant 0 : i32
    return %c0_i32, %arg0 : i32, i32
  }
}

</mosaic_0001>

<llo_original>
// kernel: tpu_custom_call.1
$region0: #{tpu_custom_call.1}
  #allocation0 [shape = 'u32[]', space=smem, size = 0x4, offset = 0x4, fixed_abs, tag = 'smem constant byte address 0x4 - core index']
  #allocation1 [shape = 'u32[144,128]{1,0:T(1,128)}', space=vmem, size = 0x12000, scoped, tag = 'internal scratch']
  #allocation2 [shape = 'f32[1,1]{1,0:T(1,128)S(1)}', space=vmem, size = 0x200, scoped, tag = 'scoped memory for tpu_custom_call.1']
  %s0 = inlined_call_operand.vmem [shape: bf16[512,80], index: 0, kind: input, shape index: {}]
  %s1 = inlined_call_operand.vmem [shape: bf16[80,48], index: 1, kind: input, shape index: {}]
  %s2 = inlined_call_operand.vmem [shape: f32[1,48], index: 2, kind: input, shape index: {}]
  %s3 = inlined_call_operand.vmem [shape: f32[48,64], index: 3, kind: input, shape index: {}]
  %s4 = inlined_call_operand.vmem [shape: f32[1,64], index: 4, kind: input, shape index: {}]
  %s5 = inlined_call_operand.vmem [shape: f32[64,32], index: 5, kind: input, shape index: {}]
  %s6 = inlined_call_operand.vmem [shape: f32[1,32], index: 6, kind: input, shape index: {}]
  %s7 = inlined_call_operand.vmem [shape: f32[1,32], index: 7, kind: input, shape index: {}]
  %s8 = inlined_call_operand.<no memory space> [shape: f32[1,1], index: 8, kind: input, shape index: {}]
  %s9 = inlined_call_operand.hbm [shape: f32[1,512], index: 9, kind: output, shape index: {}]
  %s10 = sld [smem:[#allocation0]]
  $region69: #{tpu_custom_call.1} parent=0
    _
  %s12 = ssub.s32 1, %s10
  %s13 = scalar_select 0, %s12, %s10
  %v14 = vstv %s8
  %15 = vst [vmem:[#allocation2] sm:$0x1] %v14
  $region1: #{tpu_custom_call.1} parent=0
    #allocation3 [shape = 'u8[2048]{0}', space=vmem, size = 0x800, scoped, tag = 'output window, operand 0']
    #allocation4 [shape = 's32[2]{0}', space=sflag, size = 0x8, scoped, tag = 'scoped memory for tpu_custom_call.1']
    %16 = vsyncpa [#allocation4], 0
    %s17 = scalar_lea.sflag [#allocation4], 1
    %18 = vsyncpa %s17, 0
    loop: start=0, step=1, limit=4
    $region2: #{tpu_custom_call.1} parent=1 // loop_pre_header
      _
    $region3: #{tpu_custom_call.1} parent=1 // loop_header
      %s20 = sphi 0, %s24
      %p21 = scmp.ge.s32.totalorder %s20, 4
      %s30 = sphi 0, %s32
      %s33 = sphi 0, %s30
      %s34 = sphi 0, %s33
      %s50 = sphi 0, %s34
      %s54 = sphi 0, %s54
      %s56 = sphi 0, %s54
      %s57 = sphi 0, %s56
      %s71 = sphi 0, %s57
      %s75 = sphi 0, %s75
      %s77 = sphi 0, %s75
      %s78 = sphi 0, %s77
      %s92 = sphi 0, %s78
      %s96 = sphi 0, %s96
      %s98 = sphi 0, %s96
      %s99 = sphi 0, %s98
      %s113 = sphi 0, %s99
      %s117 = sphi 0, %s117
      %s119 = sphi 0, %s117
      %s120 = sphi 0, %s119
      %s134 = sphi 0, %s120
      %s138 = sphi 0, %s138
      %s140 = sphi 0, %s138
      %s141 = sphi 0, %s140
      %s155 = sphi 0, %s141
      %s159 = sphi 0, %s159
      %s161 = sphi 0, %s159
      %s162 = sphi 0, %s161
      %s176 = sphi 0, %s162
      %s180 = sphi 0, %s180
      %s182 = sphi 0, %s180
      %s183 = sphi 0, %s182
      %s197 = sphi 0, %s183
      %s201 = sphi 0, %s201
      %s203 = sphi 0, %s201
      %s204 = sphi 0, %s203
      %s218 = sphi 0, %s204
      %s224 = sphi 0, %s226
      %s227 = sphi 0, %s224
      %s228 = sphi 0, %s227
      %s244 = sphi 0, %s228
    $region4: #{tpu_custom_call.1} parent=1 // loop_header_branch
      %23 = sbr.rel (%p21) target = $region8
    $region5: #{tpu_custom_call.1} parent=1 // loop_body
      %s25 = ssub.s32 %s20, 1
      %s26 = ssub.s32 %s20, 2
      %s27 = sadd.s32 %s20, 1
      %s28 = ssub.s32 %s20, %s27
      %p29 = scmp.eq.s32.totalorder %s28, 0
      %s31 = sadd.s32 %s30, 1
      %s32 = scalar_select %p29, %s30, %s31
      %p35 = pneg %p29
      %p36 = scmp.eq.s32.totalorder %s20, 1
      %p37 = por %p35, %p36
      %p38 = scmp.ne.s32.totalorder %s30, %s33
      %p39 = scmp.eq.s32.totalorder %s20, 0
      %p40 = por %p38, %p39
      %p41 = scmp.ne.s32.totalorder %s30, %s33
      %p42 = scmp.eq.s32.totalorder %s25, 1
      %p43 = por %p41, %p42
      %p44 = scmp.ne.s32.totalorder %s33, %s34
      %p45 = scmp.eq.s32.totalorder %s25, 0
      %p46 = por %p44, %p45
      %p47 = scmp.ne.s32.totalorder %s33, %s34
      %p48 = scmp.eq.s32.totalorder %s26, 1
      %p49 = por %p47, %p48
      %p51 = scmp.ne.s32.totalorder %s34, %s50
      %p52 = scmp.eq.s32.totalorder %s26, 0
      %p53 = por %p51, %p52
      %s55 = sadd.s32 %s54, 1
      %p58 = scmp.eq.s32.totalorder %s20, 1
      %p59 = scmp.ne.s32.totalorder %s54, %s56
      %p60 = scmp.eq.s32.totalorder %s20, 0
      %p61 = por %p59, %p60
      %p62 = scmp.ne.s32.totalorder %s54, %s56
      %p63 = scmp.eq.s32.totalorder %s25, 1
      %p64 = por %p62, %p63
      %p65 = scmp.ne.s32.totalorder %s56, %s57
      %p66 = scmp.eq.s32.totalorder %s25, 0
      %p67 = por %p65, %p66
      %p68 = scmp.ne.s32.totalorder %s56, %s57
      %p69 = scmp.eq.s32.totalorder %s26, 1
      %p70 = por %p68, %p69
      %p72 = scmp.ne.s32.totalorder %s57, %s71
      %p73 = scmp.eq.s32.totalorder %s26, 0
      %p74 = por %p72, %p73
      %s76 = sadd.s32 %s75, 1
      %p79 = scmp.eq.s32.totalorder %s20, 1
      %p80 = scmp.ne.s32.totalorder %s75, %s77
      %p81 = scmp.eq.s32.totalorder %s20, 0
      %p82 = por %p80, %p81
      %p83 = scmp.ne.s32.totalorder %s75, %s77
      %p84 = scmp.eq.s32.totalorder %s25, 1
      %p85 = por %p83, %p84
      %p86 = scmp.ne.s32.totalorder %s77, %s78
      %p87 = scmp.eq.s32.totalorder %s25, 0
      %p88 = por %p86, %p87
      %p89 = scmp.ne.s32.totalorder %s77, %s78
      %p90 = scmp.eq.s32.totalorder %s26, 1
      %p91 = por %p89, %p90
      %p93 = scmp.ne.s32.totalorder %s78, %s92
      %p94 = scmp.eq.s32.totalorder %s26, 0
      %p95 = por %p93, %p94
      %s97 = sadd.s32 %s96, 1
      %p100 = scmp.eq.s32.totalorder %s20, 1
      %p101 = scmp.ne.s32.totalorder %s96, %s98
      %p102 = scmp.eq.s32.totalorder %s20, 0
      %p103 = por %p101, %p102
      %p104 = scmp.ne.s32.totalorder %s96, %s98
      %p105 = scmp.eq.s32.totalorder %s25, 1
      %p106 = por %p104, %p105
      %p107 = scmp.ne.s32.totalorder %s98, %s99
      %p108 = scmp.eq.s32.totalorder %s25, 0
      %p109 = por %p107, %p108
      %p110 = scmp.ne.s32.totalorder %s98, %s99
      %p111 = scmp.eq.s32.totalorder %s26, 1
      %p112 = por %p110, %p111
      %p114 = scmp.ne.s32.totalorder %s99, %s113
      %p115 = scmp.eq.s32.totalorder %s26, 0
      %p116 = por %p114, %p115
      %s118 = sadd.s32 %s117, 1
      %p121 = scmp.eq.s32.totalorder %s20, 1
      %p122 = scmp.ne.s32.totalorder %s117, %s119
      %p123 = scmp.eq.s32.totalorder %s20, 0
      %p124 = por %p122, %p123
      %p125 = scmp.ne.s32.totalorder %s117, %s119
      %p126 = scmp.eq.s32.totalorder %s25, 1
      %p127 = por %p125, %p126
      %p128 = scmp.ne.s32.totalorder %s119, %s120
      %p129 = scmp.eq.s32.totalorder %s25, 0
      %p130 = por %p128, %p129
      %p131 = scmp.ne.s32.totalorder %s119, %s120
      %p132 = scmp.eq.s32.totalorder %s26, 1
      %p133 = por %p131, %p132
      %p135 = scmp.ne.s32.totalorder %s120, %s134
      %p136 = scmp.eq.s32.totalorder %s26, 0
      %p137 = por %p135, %p136
      %s139 = sadd.s32 %s138, 1
      %p142 = scmp.eq.s32.totalorder %s20, 1
      %p143 = scmp.ne.s32.totalorder %s138, %s140
      %p144 = scmp.eq.s32.totalorder %s20, 0
      %p145 = por %p143, %p144
      %p146 = scmp.ne.s32.totalorder %s138, %s140
      %p147 = scmp.eq.s32.totalorder %s25, 1
      %p148 = por %p146, %p147
      %p149 = scmp.ne.s32.totalorder %s140, %s141
      %p150 = scmp.eq.s32.totalorder %s25, 0
      %p151 = por %p149, %p150
      %p152 = scmp.ne.s32.totalorder %s140, %s141
      %p153 = scmp.eq.s32.totalorder %s26, 1
      %p154 = por %p152, %p153
      %p156 = scmp.ne.s32.totalorder %s141, %s155
      %p157 = scmp.eq.s32.totalorder %s26, 0
      %p158 = por %p156, %p157
      %s160 = sadd.s32 %s159, 1
      %p163 = scmp.eq.s32.totalorder %s20, 1
      %p164 = scmp.ne.s32.totalorder %s159, %s161
      %p165 = scmp.eq.s32.totalorder %s20, 0
      %p166 = por %p164, %p165
      %p167 = scmp.ne.s32.totalorder %s159, %s161
      %p168 = scmp.eq.s32.totalorder %s25, 1
      %p169 = por %p167, %p168
      %p170 = scmp.ne.s32.totalorder %s161, %s162
      %p171 = scmp.eq.s32.totalorder %s25, 0
      %p172 = por %p170, %p171
      %p173 = scmp.ne.s32.totalorder %s161, %s162
      %p174 = scmp.eq.s32.totalorder %s26, 1
      %p175 = por %p173, %p174
      %p177 = scmp.ne.s32.totalorder %s162, %s176
      %p178 = scmp.eq.s32.totalorder %s26, 0
      %p179 = por %p177, %p178
      %s181 = sadd.s32 %s180, 1
      %p184 = scmp.eq.s32.totalorder %s20, 1
      %p185 = scmp.ne.s32.totalorder %s180, %s182
      %p186 = scmp.eq.s32.totalorder %s20, 0
      %p187 = por %p185, %p186
      %p188 = scmp.ne.s32.totalorder %s180, %s182
      %p189 = scmp.eq.s32.totalorder %s25, 1
      %p190 = por %p188, %p189
      %p191 = scmp.ne.s32.totalorder %s182, %s183
      %p192 = scmp.eq.s32.totalorder %s25, 0
      %p193 = por %p191, %p192
      %p194 = scmp.ne.s32.totalorder %s182, %s183
      %p195 = scmp.eq.s32.totalorder %s26, 1
      %p196 = por %p194, %p195
      %p198 = scmp.ne.s32.totalorder %s183, %s197
      %p199 = scmp.eq.s32.totalorder %s26, 0
      %p200 = por %p198, %p199
      %s202 = sadd.s32 %s201, 1
      %p205 = scmp.eq.s32.totalorder %s20, 1
      %p206 = scmp.ne.s32.totalorder %s201, %s203
      %p207 = scmp.eq.s32.totalorder %s20, 0
      %p208 = por %p206, %p207
      %p209 = scmp.ne.s32.totalorder %s201, %s203
      %p210 = scmp.eq.s32.totalorder %s25, 1
      %p211 = por %p209, %p210
      %p212 = scmp.ne.s32.totalorder %s203, %s204
      %p213 = scmp.eq.s32.totalorder %s25, 0
      %p214 = por %p212, %p213
      %p215 = scmp.ne.s32.totalorder %s203, %s204
      %p216 = scmp.eq.s32.totalorder %s26, 1
      %p217 = por %p215, %p216
      %p219 = scmp.ne.s32.totalorder %s204, %s218
      %p220 = scmp.eq.s32.totalorder %s26, 0
      %p221 = por %p219, %p220
      %s222 = ssub.s32 %s20, %s27
      %p223 = scmp.eq.s32.totalorder %s222, 0
      %s225 = sadd.s32 %s224, 1
      %s226 = scalar_select %p223, %s224, %s225
      %p229 = pneg %p223
      %p230 = scmp.eq.s32.totalorder %s20, 1
      %p231 = por %p229, %p230
      %p232 = scmp.ne.s32.totalorder %s224, %s227
      %p233 = scmp.eq.s32.totalorder %s20, 0
      %p234 = por %p232, %p233
      %p235 = scmp.ne.s32.totalorder %s224, %s227
      %p236 = scmp.eq.s32.totalorder %s25, 1
      %p237 = por %p235, %p236
      %p238 = scmp.ne.s32.totalorder %s227, %s228
      %p239 = scmp.eq.s32.totalorder %s25, 0
      %p240 = por %p238, %p239
      %p241 = scmp.ne.s32.totalorder %s227, %s228
      %p242 = scmp.eq.s32.totalorder %s26, 1
      %p243 = por %p241, %p242
      %p245 = scmp.ne.s32.totalorder %s228, %s244
      %p246 = scmp.eq.s32.totalorder %s26, 0
      %p247 = por %p245, %p246
      %p248 = scmp.le.s32.totalorder 1, %s20
      %p249 = scmp.lt.s32.totalorder %s20, 3
      %p250 = pnand %p248, %p249
      %p251 = pneg %p250
      // Predicated region
      $region9: #{tpu_custom_call.1} parent=5 // pred_check
        _
      $region10: #{tpu_custom_call.1} parent=5 // pred_check_branch
        %253 = sbr.rel (%p250) target = $region12
      $region11: #{tpu_custom_call.1} parent=5 // pred_region
        %s254 = ssub.s32 %s20, 1
        // Predicated region
        $region13: #{tpu_custom_call.1} parent=11 // pred_check
          %p255 = pneg %p67
        $region14: #{tpu_custom_call.1} parent=11 // pred_check_branch
          %257 = sbr.rel (%p255) target = $region16
        $region15: #{tpu_custom_call.1} parent=11 // pred_region
          _
        $region16: #{tpu_custom_call.1} parent=11 // pred_fallthru
          _
        // Predicated region
        $region17: #{tpu_custom_call.1} parent=11 // pred_check
          %p258 = pneg %p88
        $region18: #{tpu_custom_call.1} parent=11 // pred_check_branch
          %260 = sbr.rel (%p258) target = $region20
        $region19: #{tpu_custom_call.1} parent=11 // pred_region
          _
        $region20: #{tpu_custom_call.1} parent=11 // pred_fallthru
          _
        // Predicated region
        $region21: #{tpu_custom_call.1} parent=11 // pred_check
          %p261 = pneg %p109
        $region22: #{tpu_custom_call.1} parent=11 // pred_check_branch
          %263 = sbr.rel (%p261) target = $region24
        $region23: #{tpu_custom_call.1} parent=11 // pred_region
          _
        $region24: #{tpu_custom_call.1} parent=11 // pred_fallthru
          _
        // Predicated region
        $region25: #{tpu_custom_call.1} parent=11 // pred_check
          %p264 = pneg %p130
        $region26: #{tpu_custom_call.1} parent=11 // pred_check_branch
          %266 = sbr.rel (%p264) target = $region28
        $region27: #{tpu_custom_call.1} parent=11 // pred_region
          _
        $region28: #{tpu_custom_call.1} parent=11 // pred_fallthru
          _
        // Predicated region
        $region29: #{tpu_custom_call.1} parent=11 // pred_check
          %p267 = pneg %p151
        $region30: #{tpu_custom_call.1} parent=11 // pred_check_branch
          %269 = sbr.rel (%p267) target = $region32
        $region31: #{tpu_custom_call.1} parent=11 // pred_region
          _
        $region32: #{tpu_custom_call.1} parent=11 // pred_fallthru
          _
        // Predicated region
        $region33: #{tpu_custom_call.1} parent=11 // pred_check
          %p270 = pneg %p172
        $region34: #{tpu_custom_call.1} parent=11 // pred_check_branch
          %272 = sbr.rel (%p270) target = $region36
        $region35: #{tpu_custom_call.1} parent=11 // pred_region
          _
        $region36: #{tpu_custom_call.1} parent=11 // pred_fallthru
          _
        // Predicated region
        $region37: #{tpu_custom_call.1} parent=11 // pred_check
          %p273 = pneg %p193
        $region38: #{tpu_custom_call.1} parent=11 // pred_check_branch
          %275 = sbr.rel (%p273) target = $region40
        $region39: #{tpu_custom_call.1} parent=11 // pred_region
          _
        $region40: #{tpu_custom_call.1} parent=11 // pred_fallthru
          _
        // Predicated region
        $region41: #{tpu_custom_call.1} parent=11 // pred_check
          %p276 = pneg %p214
        $region42: #{tpu_custom_call.1} parent=11 // pred_check_branch
          %278 = sbr.rel (%p276) target = $region44
        $region43: #{tpu_custom_call.1} parent=11 // pred_region
          _
        $region44: #{tpu_custom_call.1} parent=11 // pred_fallthru
          _
      $region12: #{tpu_custom_call.1} parent=5 // pred_fallthru
        _
      %p279 = scmp.lt.s32.totalorder %s20, 2
      // Predicated region
      $region45: #{tpu_custom_call.1} parent=5 // pred_check
        %p280 = pneg %p279
      $region46: #{tpu_custom_call.1} parent=5 // pred_check_branch
        %282 = sbr.rel (%p280) target = $region48
      $region47: #{tpu_custom_call.1} parent=5 // pred_region
        // Predicated region
        $region49: #{tpu_custom_call.1} parent=47 // pred_check
          %p283 = pneg %p40
        $region50: #{tpu_custom_call.1} parent=47 // pred_check_branch
          %285 = sbr.rel (%p283) target = $region52
        $region51: #{tpu_custom_call.1} parent=47 // pred_region
          %s286 = smul.u32 32, %s20
          %p287 = scmp.lt.s32.totalorder %s286, 63
          %s288 = scalar_select %p287, %s286, 63
          %s289 = smul.addr %s288, 4
          %s290 = scalar_lea.vmem %s0, %s289
          %s291 = smul.u32 32, %s20
        $region52: #{tpu_custom_call.1} parent=47 // pred_fallthru
          _
      $region48: #{tpu_custom_call.1} parent=5 // pred_fallthru
        _
      %p292 = scmp.le.s32.totalorder 1, %s20
      %p293 = scmp.lt.s32.totalorder %s20, 3
      %p294 = pnand %p292, %p293
      %p295 = pneg %p294
      // Predicated region
      $region53: #{tpu_custom_call.1} parent=5 // pred_check
        _
      $region54: #{tpu_custom_call.1} parent=5 // pred_check_branch
        %297 = sbr.rel (%p294) target = $region56
      $region55: #{tpu_custom_call.1} parent=5 // pred_region
        %s298 = ssub.s32 %s20, 1
        %s299 = smul.u32 32, %s25
        %p300 = scmp.lt.s32.totalorder %s299, 63
        %s301 = scalar_select %p300, %s299, 63
        %s302 = smul.addr %s301, 4
        %s303 = scalar_lea.vmem %s0, %s302
        %p304 = pneg %p46
        %p305 = pneg %p43
        %p306 = pneg %p67
        %p307 = pneg %p64
        %p308 = pneg %p88
        %p309 = pneg %p85
        %p310 = pneg %p109
        %p311 = pneg %p106
        %p312 = pneg %p130
        %p313 = pneg %p127
        %p314 = pneg %p151
        %p315 = pneg %p148
        %p316 = pneg %p172
        %p317 = pneg %p169
        %p318 = pneg %p193
        %p319 = pneg %p190
        %p320 = pneg %p214
        %p321 = pneg %p211
        %p322 = pneg %p240
        %p323 = pneg %p237
        %s324 = sand.u32 %s227, 1
        %s325 = scalar_lea.sflag [#allocation4], %s324
        %s326 = sand.u32 %s227, 1
        %s327 = smul.addr %s326, 2
        %s328 = scalar_lea.vmem [#allocation3], %s327
        %s329 = smul.u32 32, %s25
        %p330 = scmp.lt.s32.totalorder %s329, 63
        %s331 = scalar_select %p330, %s329, 63
        %s332 = smul.addr %s331, 4
        %s333 = scalar_lea.vmem %s0, %s332
        %s334 = smul.u32 32, %s25
        %s335 = smul.u32 2, %s25
        %v337 = vld [vmem:[%s333] sm:$0xf]
        %v338 = vld [vmem:[%s333 + $0x4] sm:$0xf]
        %v339 = vld [vmem:[%s333 + $0x8] sm:$0xf]
        %v340 = vld [vmem:[%s333 + $0xc] sm:$0xf]
        %v341 = vld [vmem:[%s333 + $0x10] sm:$0xf]
        %v342 = vld [vmem:[%s333 + $0x14] sm:$0xf]
        %v343 = vld [vmem:[%s333 + $0x18] sm:$0xf]
        %v344 = vld [vmem:[%s333 + $0x1c] sm:$0xf]
        %v345 = vld [vmem:[%s333 + $0x20] sm:$0xf]
        %v346 = vld [vmem:[%s333 + $0x24] sm:$0xf]
        %v347 = vld [vmem:[%s333 + $0x28] sm:$0xf]
        %v348 = vld [vmem:[%s333 + $0x2c] sm:$0xf]
        %v349 = vld [vmem:[%s333 + $0x30] sm:$0xf]
        %v350 = vld [vmem:[%s333 + $0x34] sm:$0xf]
        %v351 = vld [vmem:[%s333 + $0x38] sm:$0xf]
        %v352 = vld [vmem:[%s333 + $0x3c] sm:$0xf]
        %v353 = vld [vmem:[%s333 + $0x40] sm:$0xf]
        %v354 = vld [vmem:[%s333 + $0x44] sm:$0xf]
        %v355 = vld [vmem:[%s333 + $0x48] sm:$0xf]
        %v356 = vld [vmem:[%s333 + $0x4c] sm:$0xf]
        %v357 = vld [vmem:[%s333 + $0x50] sm:$0xf]
        %v358 = vld [vmem:[%s333 + $0x54] sm:$0xf]
        %v359 = vld [vmem:[%s333 + $0x58] sm:$0xf]
        %v360 = vld [vmem:[%s333 + $0x5c] sm:$0xf]
        %v361 = vld [vmem:[%s333 + $0x60] sm:$0xf]
        %v362 = vld [vmem:[%s333 + $0x64] sm:$0xf]
        %v363 = vld [vmem:[%s333 + $0x68] sm:$0xf]
        %v364 = vld [vmem:[%s333 + $0x6c] sm:$0xf]
        %v365 = vld [vmem:[%s333 + $0x70] sm:$0xf]
        %v366 = vld [vmem:[%s333 + $0x74] sm:$0xf]
        %v367 = vld [vmem:[%s333 + $0x78] sm:$0xf]
        %v368 = vld [vmem:[%s333 + $0x7c] sm:$0xf]
        %v369 = vld [vmem:[%s1] sm:$0xf]
        %v370 = vld [vmem:[%s1 + $0x4] sm:$0xf]
        %v371 = vld [vmem:[%s1 + $0x8] sm:$0xf]
        %v372 = vld [vmem:[%s1 + $0xc] sm:$0xf]
        %v373 = vld [vmem:[%s1 + $0x10] sm:$0xf]
        %v374 = vld [vmem:[%s1 + $0x14] sm:$0xf]
        %v375 = vld [vmem:[%s1 + $0x18] sm:$0xf]
        %v376 = vld [vmem:[%s1 + $0x1c] sm:$0xf]
        %v377 = vld [vmem:[%s1 + $0x20] sm:$0xf]
        %v378 = vld [vmem:[%s1 + $0x24] sm:$0xf]
        %v379 = vld [vmem:[%s2] sm:$0x1]
        %v381 = vlaneseq
        %v382 = vshrl.u32 %v381, 7
        %v383 = vsub.s32 0, %v382
        %v384 = vrot.slane %v379, %v383
        %v418 = vunpack.c.l.b16 %v337
        %v419 = vunpack.c.l.b16 %v338
        %v420 = vunpack.c.l.b16 %v339
        %v421 = vunpack.c.l.b16 %v340
        %v422 = vunpack.c.l.b16 %v341
        %v423 = vunpack.c.l.b16 %v342
        %v424 = vunpack.c.l.b16 %v343
        %v425 = vunpack.c.l.b16 %v344
        %v426 = vunpack.c.l.b16 %v345
        %v427 = vunpack.c.l.b16 %v346
        %v428 = vunpack.c.l.b16 %v347
        %v429 = vunpack.c.l.b16 %v348
        %v430 = vunpack.c.l.b16 %v349
        %v431 = vunpack.c.l.b16 %v350
        %v432 = vunpack.c.l.b16 %v351
        %v433 = vunpack.c.l.b16 %v352
        %v434 = vunpack.c.l.b16 %v353
        %v435 = vunpack.c.l.b16 %v354
        %v436 = vunpack.c.l.b16 %v355
        %v437 = vunpack.c.l.b16 %v356
        %v438 = vunpack.c.l.b16 %v357
        %v439 = vunpack.c.l.b16 %v358
        %v440 = vunpack.c.l.b16 %v359
        %v441 = vunpack.c.l.b16 %v360
        %v442 = vunpack.c.l.b16 %v361
        %v443 = vunpack.c.l.b16 %v362
        %v444 = vunpack.c.l.b16 %v363
        %v445 = vunpack.c.l.b16 %v364
        %v446 = vunpack.c.l.b16 %v365
        %v447 = vunpack.c.l.b16 %v366
        %v448 = vunpack.c.l.b16 %v367
        %v449 = vunpack.c.l.b16 %v368
        %v450 = vpack.c.b16 %v419, %v418
        %v451 = vpack.c.b16 %v421, %v420
        %v452 = vpack.c.b16 %v423, %v422
        %v453 = vpack.c.b16 %v425, %v424
        %v454 = vpack.c.b16 %v427, %v426
        %v455 = vpack.c.b16 %v429, %v428
        %v456 = vpack.c.b16 %v431, %v430
        %v457 = vpack.c.b16 %v433, %v432
        %v458 = vpack.c.b16 %v435, %v434
        %v459 = vpack.c.b16 %v437, %v436
        %v460 = vpack.c.b16 %v439, %v438
        %v461 = vpack.c.b16 %v441, %v440
        %v462 = vpack.c.b16 %v443, %v442
        %v463 = vpack.c.b16 %v445, %v444
        %v464 = vpack.c.b16 %v447, %v446
        %v465 = vpack.c.b16 %v449, %v448
        %v476 = vunpack.c.l.b16 %v369
        %v477 = vunpack.c.l.b16 %v370
        %v478 = vunpack.c.l.b16 %v371
        %v479 = vunpack.c.l.b16 %v372
        %v480 = vunpack.c.l.b16 %v373
        %v481 = vunpack.c.l.b16 %v374
        %v482 = vunpack.c.l.b16 %v375
        %v483 = vunpack.c.l.b16 %v376
        %v484 = vunpack.c.l.b16 %v377
        %v485 = vunpack.c.l.b16 %v378
        %v486 = vpack.c.b16 %v477, %v476
        %v487 = vpack.c.b16 %v479, %v478
        %v488 = vpack.c.b16 %v481, %v480
        %v489 = vpack.c.b16 %v483, %v482
        %v490 = vpack.c.b16 %v485, %v484
        %vm496 = vcmask 654336
        %v498 = vsel %vm496, %v450, 0
        %v501 = vsel %vm496, %v451, 0
        %v504 = vsel %vm496, %v452, 0
        %v507 = vsel %vm496, %v453, 0
        %v510 = vsel %vm496, %v454, 0
        %v513 = vsel %vm496, %v455, 0
        %v516 = vsel %vm496, %v456, 0
        %v519 = vsel %vm496, %v457, 0
        %v522 = vsel %vm496, %v458, 0
        %v525 = vsel %vm496, %v459, 0
        %v528 = vsel %vm496, %v460, 0
        %v531 = vsel %vm496, %v461, 0
        %v534 = vsel %vm496, %v462, 0
        %v537 = vsel %vm496, %v463, 0
        %v540 = vsel %vm496, %v464, 0
        %v543 = vsel %vm496, %v465, 0
        %545 = vmatprep.subr.bf16.mxu0 0
        %546 = vmatpush1.bf16.msra.mxu0 %v486
        %547 = vmatprep.subr.bf16.mxu0 0
        %548 = vmatpush1.bf16.msra.mxu0 %v487
        %549 = vmatprep.subr.bf16.mxu0 0
        %550 = vmatpush1.bf16.msra.mxu0 %v488
        %551 = vmatprep.subr.bf16.mxu0 0
        %552 = vmatpush1.bf16.msra.mxu0 %v489
        %553 = vmatprep.subr.bf16.mxu0 0
        %554 = vmatpush1.bf16.msra.mxu0 %v490
        %555 = vmatprep.subr.bf16.mxu0 0
        %556 = vmatpush1.bf16.msra.mxu0 0
        %557 = vmatprep.subr.bf16.mxu0 0
        %558 = vmatpush1.bf16.msra.mxu0 0
        %559 = vmatprep.subr.bf16.mxu0 0
        %560 = vmatpush1.bf16.msra.mxu0 0
        %561 = vmatprep.subr.bf16.mxu0 0
        %562 = vmatpush1.bf16.msra.mxu0 0
        %563 = vmatprep.subr.bf16.mxu0 0
        %564 = vmatpush1.bf16.msra.mxu0 0
        %565 = vmatprep.subr.bf16.mxu0 0
        %566 = vmatpush1.bf16.msra.mxu0 0
        %567 = vmatprep.subr.bf16.mxu0 0
        %568 = vmatpush1.bf16.msra.mxu0 0
        %569 = vmatprep.subr.bf16.mxu0 0
        %570 = vmatpush1.bf16.msra.mxu0 0
        %571 = vmatprep.subr.bf16.mxu0 0
        %572 = vmatpush1.bf16.msra.mxu0 0
        %573 = vmatprep.subr.bf16.mxu0 0
        %574 = vmatpush1.bf16.msra.mxu0 0
        %575 = vmatprep.subr.bf16.mxu0 0
        %576 = vmatpush1.bf16.msra.mxu0 0
        %577 = vmatprep.mubr.bf16.mxu0 0
        %578 = vmatmul.mubr.bf16.gmra.mrb[0].mxu0 %v498
        %v579 = vpop.f32.mrb[0].mxu0
        %v580 = vadd.f32 %v384, %v579
        %v581 = vpop.f32.mrb[0].mxu0
        %v582 = vpop.f32.mrb[0].mxu0
        %v583 = vadd.f32 %v384, %v582
        %v584 = vpop.f32.mrb[0].mxu0
        %585 = vmatprep.mubr.bf16.mxu0 0
        %586 = vmatmul.mubr.bf16.gmra.mrb[0].mxu0 %v501
        %v587 = vpop.f32.mrb[0].mxu0
        %v588 = vadd.f32 %v384, %v587
        %v589 = vpop.f32.mrb[0].mxu0
        %v590 = vpop.f32.mrb[0].mxu0
        %v591 = vadd.f32 %v384, %v590
        %v592 = vpop.f32.mrb[0].mxu0
        %593 = vmatprep.mubr.bf16.mxu0 0
        %594 = vmatmul.mubr.bf16.gmra.mrb[0].mxu0 %v504
        %v595 = vpop.f32.mrb[0].mxu0
        %v596 = vadd.f32 %v384, %v595
        %v597 = vpop.f32.mrb[0].mxu0
        %v598 = vpop.f32.mrb[0].mxu0
        %v599 = vadd.f32 %v384, %v598
        %v600 = vpop.f32.mrb[0].mxu0
        %601 = vmatprep.mubr.bf16.mxu0 0
        %602 = vmatmul.mubr.bf16.gmra.mrb[0].mxu0 %v507
        %v603 = vpop.f32.mrb[0].mxu0
        %v604 = vadd.f32 %v384, %v603
        %v605 = vpop.f32.mrb[0].mxu0
        %v606 = vpop.f32.mrb[0].mxu0
        %v607 = vadd.f32 %v384, %v606
        %v608 = vpop.f32.mrb[0].mxu0
        %609 = vmatprep.mubr.bf16.mxu0 0
        %610 = vmatmul.mubr.bf16.gmra.mrb[0].mxu0 %v510
        %v611 = vpop.f32.mrb[0].mxu0
        %v612 = vadd.f32 %v384, %v611
        %v613 = vpop.f32.mrb[0].mxu0
        %v614 = vpop.f32.mrb[0].mxu0
        %v615 = vadd.f32 %v384, %v614
        %v616 = vpop.f32.mrb[0].mxu0
        %617 = vmatprep.mubr.bf16.mxu0 0
        %618 = vmatmul.mubr.bf16.gmra.mrb[0].mxu0 %v513
        %v619 = vpop.f32.mrb[0].mxu0
        %v620 = vadd.f32 %v384, %v619
        %v621 = vpop.f32.mrb[0].mxu0
        %v622 = vpop.f32.mrb[0].mxu0
        %v623 = vadd.f32 %v384, %v622
        %v624 = vpop.f32.mrb[0].mxu0
        %625 = vmatprep.mubr.bf16.mxu0 0
        %626 = vmatmul.mubr.bf16.gmra.mrb[0].mxu0 %v516
        %v627 = vpop.f32.mrb[0].mxu0
        %v628 = vadd.f32 %v384, %v627
        %v629 = vpop.f32.mrb[0].mxu0
        %v630 = vpop.f32.mrb[0].mxu0
        %v631 = vadd.f32 %v384, %v630
        %v632 = vpop.f32.mrb[0].mxu0
        %633 = vmatprep.mubr.bf16.mxu0 0
        %634 = vmatmul.mubr.bf16.gmra.mrb[0].mxu0 %v519
        %v635 = vpop.f32.mrb[0].mxu0
        %v636 = vadd.f32 %v384, %v635
        %v637 = vpop.f32.mrb[0].mxu0
        %v638 = vpop.f32.mrb[0].mxu0
        %v639 = vadd.f32 %v384, %v638
        %v640 = vpop.f32.mrb[0].mxu0
        %641 = vmatprep.mubr.bf16.mxu0 0
        %642 = vmatmul.mubr.bf16.gmra.mrb[0].mxu0 %v522
        %v643 = vpop.f32.mrb[0].mxu0
        %v644 = vadd.f32 %v384, %v643
        %v645 = vpop.f32.mrb[0].mxu0
        %v646 = vpop.f32.mrb[0].mxu0
        %v647 = vadd.f32 %v384, %v646
        %v648 = vpop.f32.mrb[0].mxu0
        %649 = vmatprep.mubr.bf16.mxu0 0
        %650 = vmatmul.mubr.bf16.gmra.mrb[0].mxu0 %v525
        %v651 = vpop.f32.mrb[0].mxu0
        %v652 = vadd.f32 %v384, %v651
        %v653 = vpop.f32.mrb[0].mxu0
        %v654 = vpop.f32.mrb[0].mxu0
        %v655 = vadd.f32 %v384, %v654
        %v656 = vpop.f32.mrb[0].mxu0
        %657 = vmatprep.mubr.bf16.mxu0 0
        %658 = vmatmul.mubr.bf16.gmra.mrb[0].mxu0 %v528
        %v659 = vpop.f32.mrb[0].mxu0
        %v660 = vadd.f32 %v384, %v659
        %v661 = vpop.f32.mrb[0].mxu0
        %v662 = vpop.f32.mrb[0].mxu0
        %v663 = vadd.f32 %v384, %v662
        %v664 = vpop.f32.mrb[0].mxu0
        %665 = vmatprep.mubr.bf16.mxu0 0
        %666 = vmatmul.mubr.bf16.gmra.mrb[0].mxu0 %v531
        %v667 = vpop.f32.mrb[0].mxu0
        %v668 = vadd.f32 %v384, %v667
        %v669 = vpop.f32.mrb[0].mxu0
        %v670 = vpop.f32.mrb[0].mxu0
        %v671 = vadd.f32 %v384, %v670
        %v672 = vpop.f32.mrb[0].mxu0
        %673 = vmatprep.mubr.bf16.mxu0 0
        %674 = vmatmul.mubr.bf16.gmra.mrb[0].mxu0 %v534
        %v675 = vpop.f32.mrb[0].mxu0
        %v676 = vadd.f32 %v384, %v675
        %v677 = vpop.f32.mrb[0].mxu0
        %v678 = vpop.f32.mrb[0].mxu0
        %v679 = vadd.f32 %v384, %v678
        %v680 = vpop.f32.mrb[0].mxu0
        %681 = vmatprep.mubr.bf16.mxu0 0
        %682 = vmatmul.mubr.bf16.gmra.mrb[0].mxu0 %v537
        %v683 = vpop.f32.mrb[0].mxu0
        %v684 = vadd.f32 %v384, %v683
        %v685 = vpop.f32.mrb[0].mxu0
        %v686 = vpop.f32.mrb[0].mxu0
        %v687 = vadd.f32 %v384, %v686
        %v688 = vpop.f32.mrb[0].mxu0
        %689 = vmatprep.mubr.bf16.mxu0 0
        %690 = vmatmul.mubr.bf16.gmra.mrb[0].mxu0 %v540
        %v691 = vpop.f32.mrb[0].mxu0
        %v692 = vadd.f32 %v384, %v691
        %v693 = vpop.f32.mrb[0].mxu0
        %v694 = vpop.f32.mrb[0].mxu0
        %v695 = vadd.f32 %v384, %v694
        %v696 = vpop.f32.mrb[0].mxu0
        %697 = vmatprep.mubr.bf16.mxu0 0
        %698 = vmatmul.mubr.bf16.gmra.mrb[0].mxu0 %v543
        %v699 = vpop.f32.mrb[0].mxu0
        %v700 = vadd.f32 %v384, %v699
        %v701 = vpop.f32.mrb[0].mxu0
        %v702 = vpop.f32.mrb[0].mxu0
        %v703 = vadd.f32 %v384, %v702
        %v704 = vpop.f32.mrb[0].mxu0
        %705 = vdwg.mxu0
        %v706 = vld [vmem:[%s3] sm:$0xff]
        %v707 = vld [vmem:[%s3 + $0x8] sm:$0xff]
        %v708 = vld [vmem:[%s3 + $0x10] sm:$0xff]
        %v709 = vld [vmem:[%s3 + $0x18] sm:$0xff]
        %v710 = vld [vmem:[%s3 + $0x20] sm:$0xff]
        %v711 = vld [vmem:[%s3 + $0x28] sm:$0xff]
        %v712 = vld [vmem:[%s4] sm:$0x1]
        %v714 = vlaneseq
        %v715 = vshrl.u32 %v714, 7
        %v716 = vsub.s32 0, %v715
        %v717 = vrot.slane %v712, %v716
        %vm719 = vcmask 392192
        %v721 = vsel %vm719, %v580, 0
        %v724 = vsel %vm719, %v583, 0
        %v727 = vsel %vm719, %v588, 0
        %v730 = vsel %vm719, %v591, 0
        %v733 = vsel %vm719, %v596, 0
        %v736 = vsel %vm719, %v599, 0
        %v739 = vsel %vm719, %v604, 0
        %v742 = vsel %vm719, %v607, 0
        %v745 = vsel %vm719, %v612, 0
        %v748 = vsel %vm719, %v615, 0
        %v751 = vsel %vm719, %v620, 0
        %v754 = vsel %vm719, %v623, 0
        %v757 = vsel %vm719, %v628, 0
        %v760 = vsel %vm719, %v631, 0
        %v763 = vsel %vm719, %v636, 0
        %v766 = vsel %vm719, %v639, 0
        %v769 = vsel %vm719, %v644, 0
        %v772 = vsel %vm719, %v647, 0
        %v775 = vsel %vm719, %v652, 0
        %v778 = vsel %vm719, %v655, 0
        %v781 = vsel %vm719, %v660, 0
        %v784 = vsel %vm719, %v663, 0
        %v787 = vsel %vm719, %v668, 0
        %v790 = vsel %vm719, %v671, 0
        %v793 = vsel %vm719, %v676, 0
        %v796 = vsel %vm719, %v679, 0
        %v799 = vsel %vm719, %v684, 0
        %v802 = vsel %vm719, %v687, 0
        %v805 = vsel %vm719, %v692, 0
        %v808 = vsel %vm719, %v695, 0
        %v811 = vsel %vm719, %v700, 0
        %v814 = vsel %vm719, %v703, 0
        %816 = vmatprep.subr.mxu0 0.0
        %817 = vmatpush1.msra.mxu0 %v706
        %818 = vmatprep.subr.mxu0 0.0
        %819 = vmatpush1.msra.mxu0 %v707
        %820 = vmatprep.subr.mxu0 0.0
        %821 = vmatpush1.msra.mxu0 %v708
        %822 = vmatprep.subr.mxu0 0.0
        %823 = vmatpush1.msra.mxu0 %v709
        %824 = vmatprep.subr.mxu0 0.0
        %825 = vmatpush1.msra.mxu0 %v710
        %826 = vmatprep.subr.mxu0 0.0
        %827 = vmatpush1.msra.mxu0 %v711
        %828 = vmatprep.subr.mxu0 0.0
        %829 = vmatpush1.msra.mxu0 0.0
        %830 = vmatprep.subr.mxu0 0.0
        %831 = vmatpush1.msra.mxu0 0.0
        %832 = vmatprep.subr.mxu0 0.0
        %833 = vmatpush1.msra.mxu0 0.0
        %834 = vmatprep.subr.mxu0 0.0
        %835 = vmatpush1.msra.mxu0 0.0
        %836 = vmatprep.subr.mxu0 0.0
        %837 = vmatpush1.msra.mxu0 0.0
        %838 = vmatprep.subr.mxu0 0.0
        %839 = vmatpush1.msra.mxu0 0.0
        %840 = vmatprep.subr.mxu0 0.0
        %841 = vmatpush1.msra.mxu0 0.0
        %842 = vmatprep.subr.mxu0 0.0
        %843 = vmatpush1.msra.mxu0 0.0
        %844 = vmatprep.subr.mxu0 0.0
        %845 = vmatpush1.msra.mxu0 0.0
        %846 = vmatprep.subr.mxu0 0.0
        %847 = vmatpush1.msra.mxu0 0.0
        %848 = vmatprep.subr.mxu0 0.0
        %849 = vmatpush1.msra.mxu0 0.0
        %850 = vmatprep.subr.mxu0 0.0
        %851 = vmatpush1.msra.mxu0 0.0
        %852 = vmatprep.subr.mxu0 0.0
        %853 = vmatpush1.msra.mxu0 0.0
        %854 = vmatprep.subr.mxu0 0.0
        %855 = vmatpush1.msra.mxu0 0.0
        %856 = vmatprep.subr.mxu0 0.0
        %857 = vmatpush1.msra.mxu0 0.0
        %858 = vmatprep.subr.mxu0 0.0
        %859 = vmatpush1.msra.mxu0 0.0
        %860 = vmatprep.subr.mxu0 0.0
        %861 = vmatpush1.msra.mxu0 0.0
        %862 = vmatprep.subr.mxu0 0.0
        %863 = vmatpush1.msra.mxu0 0.0
        %864 = vmatprep.subr.mxu0 0.0
        %865 = vmatpush1.msra.mxu0 0.0
        %866 = vmatprep.subr.mxu0 0.0
        %867 = vmatpush1.msra.mxu0 0.0
        %868 = vmatprep.subr.mxu0 0.0
        %869 = vmatpush1.msra.mxu0 0.0
        %870 = vmatprep.subr.mxu0 0.0
        %871 = vmatpush1.msra.mxu0 0.0
        %872 = vmatprep.subr.mxu0 0.0
        %873 = vmatpush1.msra.mxu0 0.0
        %874 = vmatprep.subr.mxu0 0.0
        %875 = vmatpush1.msra.mxu0 0.0
        %876 = vmatprep.subr.mxu0 0.0
        %877 = vmatpush1.msra.mxu0 0.0
        %878 = vmatprep.subr.mxu0 0.0
        %879 = vmatpush1.msra.mxu0 0.0
        %880 = vmatprep.mubr.f32.mxu0 0.0
        %881 = vmatmul.mubr.f32.gmra.mrb[0].mxu0 %v721
        %v882 = vpop.f32.mrb[0].mxu0
        %v883 = vadd.f32 %v717, %v882
        %v884 = vpop.f32.mrb[0].mxu0
        %885 = vmatprep.mubr.f32.mxu0 0.0
        %886 = vmatmul.mubr.f32.gmra.mrb[0].mxu0 %v724
        %v887 = vpop.f32.mrb[0].mxu0
        %v888 = vadd.f32 %v717, %v887
        %v889 = vpop.f32.mrb[0].mxu0
        %890 = vmatprep.mubr.f32.mxu0 0.0
        %891 = vmatmul.mubr.f32.gmra.mrb[0].mxu0 %v727
        %v892 = vpop.f32.mrb[0].mxu0
        %v893 = vadd.f32 %v717, %v892
        %v894 = vpop.f32.mrb[0].mxu0
        %895 = vmatprep.mubr.f32.mxu0 0.0
        %896 = vmatmul.mubr.f32.gmra.mrb[0].mxu0 %v730
        %v897 = vpop.f32.mrb[0].mxu0
        %v898 = vadd.f32 %v717, %v897
        %v899 = vpop.f32.mrb[0].mxu0
        %900 = vmatprep.mubr.f32.mxu0 0.0
        %901 = vmatmul.mubr.f32.gmra.mrb[0].mxu0 %v733
        %v902 = vpop.f32.mrb[0].mxu0
        %v903 = vadd.f32 %v717, %v902
        %v904 = vpop.f32.mrb[0].mxu0
        %905 = vmatprep.mubr.f32.mxu0 0.0
        %906 = vmatmul.mubr.f32.gmra.mrb[0].mxu0 %v736
        %v907 = vpop.f32.mrb[0].mxu0
        %v908 = vadd.f32 %v717, %v907
        %v909 = vpop.f32.mrb[0].mxu0
        %910 = vmatprep.mubr.f32.mxu0 0.0
        %911 = vmatmul.mubr.f32.gmra.mrb[0].mxu0 %v739
        %v912 = vpop.f32.mrb[0].mxu0
        %v913 = vadd.f32 %v717, %v912
        %v914 = vpop.f32.mrb[0].mxu0
        %915 = vmatprep.mubr.f32.mxu0 0.0
        %916 = vmatmul.mubr.f32.gmra.mrb[0].mxu0 %v742
        %v917 = vpop.f32.mrb[0].mxu0
        %v918 = vadd.f32 %v717, %v917
        %v919 = vpop.f32.mrb[0].mxu0
        %920 = vmatprep.mubr.f32.mxu0 0.0
        %921 = vmatmul.mubr.f32.gmra.mrb[0].mxu0 %v745
        %v922 = vpop.f32.mrb[0].mxu0
        %v923 = vadd.f32 %v717, %v922
        %v924 = vpop.f32.mrb[0].mxu0
        %925 = vmatprep.mubr.f32.mxu0 0.0
        %926 = vmatmul.mubr.f32.gmra.mrb[0].mxu0 %v748
        %v927 = vpop.f32.mrb[0].mxu0
        %v928 = vadd.f32 %v717, %v927
        %v929 = vpop.f32.mrb[0].mxu0
        %930 = vmatprep.mubr.f32.mxu0 0.0
        %931 = vmatmul.mubr.f32.gmra.mrb[0].mxu0 %v751
        %v932 = vpop.f32.mrb[0].mxu0
        %v933 = vadd.f32 %v717, %v932
        %v934 = vpop.f32.mrb[0].mxu0
        %935 = vmatprep.mubr.f32.mxu0 0.0
        %936 = vmatmul.mubr.f32.gmra.mrb[0].mxu0 %v754
        %v937 = vpop.f32.mrb[0].mxu0
        %v938 = vadd.f32 %v717, %v937
        %v939 = vpop.f32.mrb[0].mxu0
        %940 = vmatprep.mubr.f32.mxu0 0.0
        %941 = vmatmul.mubr.f32.gmra.mrb[0].mxu0 %v757
        %v942 = vpop.f32.mrb[0].mxu0
        %v943 = vadd.f32 %v717, %v942
        %v944 = vpop.f32.mrb[0].mxu0
        %945 = vmatprep.mubr.f32.mxu0 0.0
        %946 = vmatmul.mubr.f32.gmra.mrb[0].mxu0 %v760
        %v947 = vpop.f32.mrb[0].mxu0
        %v948 = vadd.f32 %v717, %v947
        %v949 = vpop.f32.mrb[0].mxu0
        %950 = vmatprep.mubr.f32.mxu0 0.0
        %951 = vmatmul.mubr.f32.gmra.mrb[0].mxu0 %v763
        %v952 = vpop.f32.mrb[0].mxu0
        %v953 = vadd.f32 %v717, %v952
        %v954 = vpop.f32.mrb[0].mxu0
        %955 = vmatprep.mubr.f32.mxu0 0.0
        %956 = vmatmul.mubr.f32.gmra.mrb[0].mxu0 %v766
        %v957 = vpop.f32.mrb[0].mxu0
        %v958 = vadd.f32 %v717, %v957
        %v959 = vpop.f32.mrb[0].mxu0
        %960 = vmatprep.mubr.f32.mxu0 0.0
        %961 = vmatmul.mubr.f32.gmra.mrb[0].mxu0 %v769
        %v962 = vpop.f32.mrb[0].mxu0
        %v963 = vadd.f32 %v717, %v962
        %v964 = vpop.f32.mrb[0].mxu0
        %965 = vmatprep.mubr.f32.mxu0 0.0
        %966 = vmatmul.mubr.f32.gmra.mrb[0].mxu0 %v772
        %v967 = vpop.f32.mrb[0].mxu0
        %v968 = vadd.f32 %v717, %v967
        %v969 = vpop.f32.mrb[0].mxu0
        %970 = vmatprep.mubr.f32.mxu0 0.0
        %971 = vmatmul.mubr.f32.gmra.mrb[0].mxu0 %v775
        %v972 = vpop.f32.mrb[0].mxu0
        %v973 = vadd.f32 %v717, %v972
        %v974 = vpop.f32.mrb[0].mxu0
        %975 = vmatprep.mubr.f32.mxu0 0.0
        %976 = vmatmul.mubr.f32.gmra.mrb[0].mxu0 %v778
        %v977 = vpop.f32.mrb[0].mxu0
        %v978 = vadd.f32 %v717, %v977
        %v979 = vpop.f32.mrb[0].mxu0
        %980 = vmatprep.mubr.f32.mxu0 0.0
        %981 = vmatmul.mubr.f32.gmra.mrb[0].mxu0 %v781
        %v982 = vpop.f32.mrb[0].mxu0
        %v983 = vadd.f32 %v717, %v982
        %v984 = vpop.f32.mrb[0].mxu0
        %985 = vmatprep.mubr.f32.mxu0 0.0
        %986 = vmatmul.mubr.f32.gmra.mrb[0].mxu0 %v784
        %v987 = vpop.f32.mrb[0].mxu0
        %v988 = vadd.f32 %v717, %v987
        %v989 = vpop.f32.mrb[0].mxu0
        %990 = vmatprep.mubr.f32.mxu0 0.0
        %991 = vmatmul.mubr.f32.gmra.mrb[0].mxu0 %v787
        %v992 = vpop.f32.mrb[0].mxu0
        %v993 = vadd.f32 %v717, %v992
        %v994 = vpop.f32.mrb[0].mxu0
        %995 = vmatprep.mubr.f32.mxu0 0.0
        %996 = vmatmul.mubr.f32.gmra.mrb[0].mxu0 %v790
        %v997 = vpop.f32.mrb[0].mxu0
        %v998 = vadd.f32 %v717, %v997
        %v999 = vpop.f32.mrb[0].mxu0
        %1000 = vmatprep.mubr.f32.mxu0 0.0
        %1001 = vmatmul.mubr.f32.gmra.mrb[0].mxu0 %v793
        %v1002 = vpop.f32.mrb[0].mxu0
        %v1003 = vadd.f32 %v717, %v1002
        %v1004 = vpop.f32.mrb[0].mxu0
        %1005 = vmatprep.mubr.f32.mxu0 0.0
        %1006 = vmatmul.mubr.f32.gmra.mrb[0].mxu0 %v796
        %v1007 = vpop.f32.mrb[0].mxu0
        %v1008 = vadd.f32 %v717, %v1007
        %v1009 = vpop.f32.mrb[0].mxu0
        %1010 = vmatprep.mubr.f32.mxu0 0.0
        %1011 = vmatmul.mubr.f32.gmra.mrb[0].mxu0 %v799
        %v1012 = vpop.f32.mrb[0].mxu0
        %v1013 = vadd.f32 %v717, %v1012
        %v1014 = vpop.f32.mrb[0].mxu0
        %1015 = vmatprep.mubr.f32.mxu0 0.0
        %1016 = vmatmul.mubr.f32.gmra.mrb[0].mxu0 %v802
        %v1017 = vpop.f32.mrb[0].mxu0
        %v1018 = vadd.f32 %v717, %v1017
        %v1019 = vpop.f32.mrb[0].mxu0
        %1020 = vmatprep.mubr.f32.mxu0 0.0
        %1021 = vmatmul.mubr.f32.gmra.mrb[0].mxu0 %v805
        %v1022 = vpop.f32.mrb[0].mxu0
        %v1023 = vadd.f32 %v717, %v1022
        %v1024 = vpop.f32.mrb[0].mxu0
        %1025 = vmatprep.mubr.f32.mxu0 0.0
        %1026 = vmatmul.mubr.f32.gmra.mrb[0].mxu0 %v808
        %v1027 = vpop.f32.mrb[0].mxu0
        %v1028 = vadd.f32 %v717, %v1027
        %v1029 = vpop.f32.mrb[0].mxu0
        %1030 = vmatprep.mubr.f32.mxu0 0.0
        %1031 = vmatmul.mubr.f32.gmra.mrb[0].mxu0 %v811
        %v1032 = vpop.f32.mrb[0].mxu0
        %v1033 = vadd.f32 %v717, %v1032
        %v1034 = vpop.f32.mrb[0].mxu0
        %1035 = vmatprep.mubr.f32.mxu0 0.0
        %1036 = vmatmul.mubr.f32.gmra.mrb[0].mxu0 %v814
        %v1037 = vpop.f32.mrb[0].mxu0
        %v1038 = vadd.f32 %v717, %v1037
        %v1039 = vpop.f32.mrb[0].mxu0
        %1040 = vdwg.mxu0
        %v1041 = vmax.f32 %v883, 0.0
        %v1042 = vmax.f32 %v888, 0.0
        %v1043 = vmax.f32 %v893, 0.0
        %v1044 = vmax.f32 %v898, 0.0
        %v1045 = vmax.f32 %v903, 0.0
        %v1046 = vmax.f32 %v908, 0.0
        %v1047 = vmax.f32 %v913, 0.0
        %v1048 = vmax.f32 %v918, 0.0
        %v1049 = vmax.f32 %v923, 0.0
        %v1050 = vmax.f32 %v928, 0.0
        %v1051 = vmax.f32 %v933, 0.0
        %v1052 = vmax.f32 %v938, 0.0
        %v1053 = vmax.f32 %v943, 0.0
        %v1054 = vmax.f32 %v948, 0.0
        %v1055 = vmax.f32 %v953, 0.0
        %v1056 = vmax.f32 %v958, 0.0
        %v1057 = vmax.f32 %v963, 0.0
        %v1058 = vmax.f32 %v968, 0.0
        %v1059 = vmax.f32 %v973, 0.0
        %v1060 = vmax.f32 %v978, 0.0
        %v1061 = vmax.f32 %v983, 0.0
        %v1062 = vmax.f32 %v988, 0.0
        %v1063 = vmax.f32 %v993, 0.0
        %v1064 = vmax.f32 %v998, 0.0
        %v1065 = vmax.f32 %v1003, 0.0
        %v1066 = vmax.f32 %v1008, 0.0
        %v1067 = vmax.f32 %v1013, 0.0
        %v1068 = vmax.f32 %v1018, 0.0
        %v1069 = vmax.f32 %v1023, 0.0
        %v1070 = vmax.f32 %v1028, 0.0
        %v1071 = vmax.f32 %v1033, 0.0
        %v1072 = vmax.f32 %v1038, 0.0
        %v1073 = vld [vmem:[%s5] sm:$0xff]
        %v1074 = vld [vmem:[%s5 + $0x8] sm:$0xff]
        %v1075 = vld [vmem:[%s5 + $0x10] sm:$0xff]
        %v1076 = vld [vmem:[%s5 + $0x18] sm:$0xff]
        %v1077 = vld [vmem:[%s5 + $0x20] sm:$0xff]
        %v1078 = vld [vmem:[%s5 + $0x28] sm:$0xff]
        %v1079 = vld [vmem:[%s5 + $0x30] sm:$0xff]
        %v1080 = vld [vmem:[%s5 + $0x38] sm:$0xff]
        %v1081 = vld [vmem:[%s6] sm:$0x1]
        %v1083 = vlaneseq
        %v1084 = vshrl.u32 %v1083, 7
        %v1085 = vsub.s32 0, %v1084
        %v1086 = vrot.slane %v1081, %v1085
        %vm1088 = vcmask 523264
        %v1090 = vsel %vm1088, %v1041, 0
        %v1093 = vsel %vm1088, %v1042, 0
        %v1096 = vsel %vm1088, %v1043, 0
        %v1099 = vsel %vm1088, %v1044, 0
        %v1102 = vsel %vm1088, %v1045, 0
        %v1105 = vsel %vm1088, %v1046, 0
        %v1108 = vsel %vm1088, %v1047, 0
        %v1111 = vsel %vm1088, %v1048, 0
        %v1114 = vsel %vm1088, %v1049, 0
        %v1117 = vsel %vm1088, %v1050, 0
        %v1120 = vsel %vm1088, %v1051, 0
        %v1123 = vsel %vm1088, %v1052, 0
        %v1126 = vsel %vm1088, %v1053, 0
        %v1129 = vsel %vm1088, %v1054, 0
        %v1132 = vsel %vm1088, %v1055, 0
        %v1135 = vsel %vm1088, %v1056, 0
        %v1138 = vsel %vm1088, %v1057, 0
        %v1141 = vsel %vm1088, %v1058, 0
        %v1144 = vsel %vm1088, %v1059, 0
        %v1147 = vsel %vm1088, %v1060, 0
        %v1150 = vsel %vm1088, %v1061, 0
        %v1153 = vsel %vm1088, %v1062, 0
        %v1156 = vsel %vm1088, %v1063, 0
        %v1159 = vsel %vm1088, %v1064, 0
        %v1162 = vsel %vm1088, %v1065, 0
        %v1165 = vsel %vm1088, %v1066, 0
        %v1168 = vsel %vm1088, %v1067, 0
        %v1171 = vsel %vm1088, %v1068, 0
        %v1174 = vsel %vm1088, %v1069, 0
        %v1177 = vsel %vm1088, %v1070, 0
        %v1180 = vsel %vm1088, %v1071, 0
        %v1183 = vsel %vm1088, %v1072, 0
        %1185 = vmatprep.subr.mxu0 0.0
        %1186 = vmatpush1.msra.mxu0 %v1073
        %1187 = vmatprep.subr.mxu0 0.0
        %1188 = vmatpush1.msra.mxu0 %v1074
        %1189 = vmatprep.subr.mxu0 0.0
        %1190 = vmatpush1.msra.mxu0 %v1075
        %1191 = vmatprep.subr.mxu0 0.0
        %1192 = vmatpush1.msra.mxu0 %v1076
        %1193 = vmatprep.subr.mxu0 0.0
        %1194 = vmatpush1.msra.mxu0 %v1077
        %1195 = vmatprep.subr.mxu0 0.0
        %1196 = vmatpush1.msra.mxu0 %v1078
        %1197 = vmatprep.subr.mxu0 0.0
        %1198 = vmatpush1.msra.mxu0 %v1079
        %1199 = vmatprep.subr.mxu0 0.0
        %1200 = vmatpush1.msra.mxu0 %v1080
        %1201 = vmatprep.subr.mxu0 0.0
        %1202 = vmatpush1.msra.mxu0 0.0
        %1203 = vmatprep.subr.mxu0 0.0
        %1204 = vmatpush1.msra.mxu0 0.0
        %1205 = vmatprep.subr.mxu0 0.0
        %1206 = vmatpush1.msra.mxu0 0.0
        %1207 = vmatprep.subr.mxu0 0.0
        %1208 = vmatpush1.msra.mxu0 0.0
        %1209 = vmatprep.subr.mxu0 0.0
        %1210 = vmatpush1.msra.mxu0 0.0
        %1211 = vmatprep.subr.mxu0 0.0
        %1212 = vmatpush1.msra.mxu0 0.0
        %1213 = vmatprep.subr.mxu0 0.0
        %1214 = vmatpush1.msra.mxu0 0.0
        %1215 = vmatprep.subr.mxu0 0.0
        %1216 = vmatpush1.msra.mxu0 0.0
        %1217 = vmatprep.subr.mxu0 0.0
        %1218 = vmatpush1.msra.mxu0 0.0
        %1219 = vmatprep.subr.mxu0 0.0
        %1220 = vmatpush1.msra.mxu0 0.0
        %1221 = vmatprep.subr.mxu0 0.0
        %1222 = vmatpush1.msra.mxu0 0.0
        %1223 = vmatprep.subr.mxu0 0.0
        %1224 = vmatpush1.msra.mxu0 0.0
        %1225 = vmatprep.subr.mxu0 0.0
        %1226 = vmatpush1.msra.mxu0 0.0
        %1227 = vmatprep.subr.mxu0 0.0
        %1228 = vmatpush1.msra.mxu0 0.0
        %1229 = vmatprep.subr.mxu0 0.0
        %1230 = vmatpush1.msra.mxu0 0.0
        %1231 = vmatprep.subr.mxu0 0.0
        %1232 = vmatpush1.msra.mxu0 0.0
        %1233 = vmatprep.subr.mxu0 0.0
        %1234 = vmatpush1.msra.mxu0 0.0
        %1235 = vmatprep.subr.mxu0 0.0
        %1236 = vmatpush1.msra.mxu0 0.0
        %1237 = vmatprep.subr.mxu0 0.0
        %1238 = vmatpush1.msra.mxu0 0.0
        %1239 = vmatprep.subr.mxu0 0.0
        %1240 = vmatpush1.msra.mxu0 0.0
        %1241 = vmatprep.subr.mxu0 0.0
        %1242 = vmatpush1.msra.mxu0 0.0
        %1243 = vmatprep.subr.mxu0 0.0
        %1244 = vmatpush1.msra.mxu0 0.0
        %1245 = vmatprep.subr.mxu0 0.0
        %1246 = vmatpush1.msra.mxu0 0.0
        %1247 = vmatprep.subr.mxu0 0.0
        %1248 = vmatpush1.msra.mxu0 0.0
        %1249 = vmatprep.mubr.f32.mxu0 0.0
        %1250 = vmatmul.mubr.f32.gmra.mrb[0].mxu0 %v1090
        %v1251 = vpop.f32.mrb[0].mxu0
        %v1252 = vadd.f32 %v1086, %v1251
        %v1253 = vpop.f32.mrb[0].mxu0
        %1254 = vmatprep.mubr.f32.mxu0 0.0
        %1255 = vmatmul.mubr.f32.gmra.mrb[0].mxu0 %v1093
        %v1256 = vpop.f32.mrb[0].mxu0
        %v1257 = vadd.f32 %v1086, %v1256
        %v1258 = vpop.f32.mrb[0].mxu0
        %1259 = vmatprep.mubr.f32.mxu0 0.0
        %1260 = vmatmul.mubr.f32.gmra.mrb[0].mxu0 %v1096
        %v1261 = vpop.f32.mrb[0].mxu0
        %v1262 = vadd.f32 %v1086, %v1261
        %v1263 = vpop.f32.mrb[0].mxu0
        %1264 = vmatprep.mubr.f32.mxu0 0.0
        %1265 = vmatmul.mubr.f32.gmra.mrb[0].mxu0 %v1099
        %v1266 = vpop.f32.mrb[0].mxu0
        %v1267 = vadd.f32 %v1086, %v1266
        %v1268 = vpop.f32.mrb[0].mxu0
        %1269 = vmatprep.mubr.f32.mxu0 0.0
        %1270 = vmatmul.mubr.f32.gmra.mrb[0].mxu0 %v1102
        %v1271 = vpop.f32.mrb[0].mxu0
        %v1272 = vadd.f32 %v1086, %v1271
        %v1273 = vpop.f32.mrb[0].mxu0
        %1274 = vmatprep.mubr.f32.mxu0 0.0
        %1275 = vmatmul.mubr.f32.gmra.mrb[0].mxu0 %v1105
        %v1276 = vpop.f32.mrb[0].mxu0
        %v1277 = vadd.f32 %v1086, %v1276
        %v1278 = vpop.f32.mrb[0].mxu0
        %1279 = vmatprep.mubr.f32.mxu0 0.0
        %1280 = vmatmul.mubr.f32.gmra.mrb[0].mxu0 %v1108
        %v1281 = vpop.f32.mrb[0].mxu0
        %v1282 = vadd.f32 %v1086, %v1281
        %v1283 = vpop.f32.mrb[0].mxu0
        %1284 = vmatprep.mubr.f32.mxu0 0.0
        %1285 = vmatmul.mubr.f32.gmra.mrb[0].mxu0 %v1111
        %v1286 = vpop.f32.mrb[0].mxu0
        %v1287 = vadd.f32 %v1086, %v1286
        %v1288 = vpop.f32.mrb[0].mxu0
        %1289 = vmatprep.mubr.f32.mxu0 0.0
        %1290 = vmatmul.mubr.f32.gmra.mrb[0].mxu0 %v1114
        %v1291 = vpop.f32.mrb[0].mxu0
        %v1292 = vadd.f32 %v1086, %v1291
        %v1293 = vpop.f32.mrb[0].mxu0
        %1294 = vmatprep.mubr.f32.mxu0 0.0
        %1295 = vmatmul.mubr.f32.gmra.mrb[0].mxu0 %v1117
        %v1296 = vpop.f32.mrb[0].mxu0
        %v1297 = vadd.f32 %v1086, %v1296
        %v1298 = vpop.f32.mrb[0].mxu0
        %1299 = vmatprep.mubr.f32.mxu0 0.0
        %1300 = vmatmul.mubr.f32.gmra.mrb[0].mxu0 %v1120
        %v1301 = vpop.f32.mrb[0].mxu0
        %v1302 = vadd.f32 %v1086, %v1301
        %v1303 = vpop.f32.mrb[0].mxu0
        %1304 = vmatprep.mubr.f32.mxu0 0.0
        %1305 = vmatmul.mubr.f32.gmra.mrb[0].mxu0 %v1123
        %v1306 = vpop.f32.mrb[0].mxu0
        %v1307 = vadd.f32 %v1086, %v1306
        %v1308 = vpop.f32.mrb[0].mxu0
        %1309 = vmatprep.mubr.f32.mxu0 0.0
        %1310 = vmatmul.mubr.f32.gmra.mrb[0].mxu0 %v1126
        %v1311 = vpop.f32.mrb[0].mxu0
        %v1312 = vadd.f32 %v1086, %v1311
        %v1313 = vpop.f32.mrb[0].mxu0
        %1314 = vmatprep.mubr.f32.mxu0 0.0
        %1315 = vmatmul.mubr.f32.gmra.mrb[0].mxu0 %v1129
        %v1316 = vpop.f32.mrb[0].mxu0
        %v1317 = vadd.f32 %v1086, %v1316
        %v1318 = vpop.f32.mrb[0].mxu0
        %1319 = vmatprep.mubr.f32.mxu0 0.0
        %1320 = vmatmul.mubr.f32.gmra.mrb[0].mxu0 %v1132
        %v1321 = vpop.f32.mrb[0].mxu0
        %v1322 = vadd.f32 %v1086, %v1321
        %v1323 = vpop.f32.mrb[0].mxu0
        %1324 = vmatprep.mubr.f32.mxu0 0.0
        %1325 = vmatmul.mubr.f32.gmra.mrb[0].mxu0 %v1135
        %v1326 = vpop.f32.mrb[0].mxu0
        %v1327 = vadd.f32 %v1086, %v1326
        %v1328 = vpop.f32.mrb[0].mxu0
        %1329 = vmatprep.mubr.f32.mxu0 0.0
        %1330 = vmatmul.mubr.f32.gmra.mrb[0].mxu0 %v1138
        %v1331 = vpop.f32.mrb[0].mxu0
        %v1332 = vadd.f32 %v1086, %v1331
        %v1333 = vpop.f32.mrb[0].mxu0
        %1334 = vmatprep.mubr.f32.mxu0 0.0
        %1335 = vmatmul.mubr.f32.gmra.mrb[0].mxu0 %v1141
        %v1336 = vpop.f32.mrb[0].mxu0
        %v1337 = vadd.f32 %v1086, %v1336
        %v1338 = vpop.f32.mrb[0].mxu0
        %1339 = vmatprep.mubr.f32.mxu0 0.0
        %1340 = vmatmul.mubr.f32.gmra.mrb[0].mxu0 %v1144
        %v1341 = vpop.f32.mrb[0].mxu0
        %v1342 = vadd.f32 %v1086, %v1341
        %v1343 = vpop.f32.mrb[0].mxu0
        %1344 = vmatprep.mubr.f32.mxu0 0.0
        %1345 = vmatmul.mubr.f32.gmra.mrb[0].mxu0 %v1147
        %v1346 = vpop.f32.mrb[0].mxu0
        %v1347 = vadd.f32 %v1086, %v1346
        %v1348 = vpop.f32.mrb[0].mxu0
        %1349 = vmatprep.mubr.f32.mxu0 0.0
        %1350 = vmatmul.mubr.f32.gmra.mrb[0].mxu0 %v1150
        %v1351 = vpop.f32.mrb[0].mxu0
        %v1352 = vadd.f32 %v1086, %v1351
        %v1353 = vpop.f32.mrb[0].mxu0
        %1354 = vmatprep.mubr.f32.mxu0 0.0
        %1355 = vmatmul.mubr.f32.gmra.mrb[0].mxu0 %v1153
        %v1356 = vpop.f32.mrb[0].mxu0
        %v1357 = vadd.f32 %v1086, %v1356
        %v1358 = vpop.f32.mrb[0].mxu0
        %1359 = vmatprep.mubr.f32.mxu0 0.0
        %1360 = vmatmul.mubr.f32.gmra.mrb[0].mxu0 %v1156
        %v1361 = vpop.f32.mrb[0].mxu0
        %v1362 = vadd.f32 %v1086, %v1361
        %v1363 = vpop.f32.mrb[0].mxu0
        %1364 = vmatprep.mubr.f32.mxu0 0.0
        %1365 = vmatmul.mubr.f32.gmra.mrb[0].mxu0 %v1159
        %v1366 = vpop.f32.mrb[0].mxu0
        %v1367 = vadd.f32 %v1086, %v1366
        %v1368 = vpop.f32.mrb[0].mxu0
        %1369 = vmatprep.mubr.f32.mxu0 0.0
        %1370 = vmatmul.mubr.f32.gmra.mrb[0].mxu0 %v1162
        %v1371 = vpop.f32.mrb[0].mxu0
        %v1372 = vadd.f32 %v1086, %v1371
        %v1373 = vpop.f32.mrb[0].mxu0
        %1374 = vmatprep.mubr.f32.mxu0 0.0
        %1375 = vmatmul.mubr.f32.gmra.mrb[0].mxu0 %v1165
        %v1376 = vpop.f32.mrb[0].mxu0
        %v1377 = vadd.f32 %v1086, %v1376
        %v1378 = vpop.f32.mrb[0].mxu0
        %1379 = vmatprep.mubr.f32.mxu0 0.0
        %1380 = vmatmul.mubr.f32.gmra.mrb[0].mxu0 %v1168
        %v1381 = vpop.f32.mrb[0].mxu0
        %v1382 = vadd.f32 %v1086, %v1381
        %v1383 = vpop.f32.mrb[0].mxu0
        %1384 = vmatprep.mubr.f32.mxu0 0.0
        %1385 = vmatmul.mubr.f32.gmra.mrb[0].mxu0 %v1171
        %v1386 = vpop.f32.mrb[0].mxu0
        %v1387 = vadd.f32 %v1086, %v1386
        %v1388 = vpop.f32.mrb[0].mxu0
        %1389 = vmatprep.mubr.f32.mxu0 0.0
        %1390 = vmatmul.mubr.f32.gmra.mrb[0].mxu0 %v1174
        %v1391 = vpop.f32.mrb[0].mxu0
        %v1392 = vadd.f32 %v1086, %v1391
        %v1393 = vpop.f32.mrb[0].mxu0
        %1394 = vmatprep.mubr.f32.mxu0 0.0
        %1395 = vmatmul.mubr.f32.gmra.mrb[0].mxu0 %v1177
        %v1396 = vpop.f32.mrb[0].mxu0
        %v1397 = vadd.f32 %v1086, %v1396
        %v1398 = vpop.f32.mrb[0].mxu0
        %1399 = vmatprep.mubr.f32.mxu0 0.0
        %1400 = vmatmul.mubr.f32.gmra.mrb[0].mxu0 %v1180
        %v1401 = vpop.f32.mrb[0].mxu0
        %v1402 = vadd.f32 %v1086, %v1401
        %v1403 = vpop.f32.mrb[0].mxu0
        %1404 = vmatprep.mubr.f32.mxu0 0.0
        %1405 = vmatmul.mubr.f32.gmra.mrb[0].mxu0 %v1183
        %v1406 = vpop.f32.mrb[0].mxu0
        %v1407 = vadd.f32 %v1086, %v1406
        %v1408 = vpop.f32.mrb[0].mxu0
        %1409 = vdwg.mxu0
        %v1410 = vmax.f32 %v1252, 0.0
        %v1411 = vmax.f32 %v1257, 0.0
        %v1412 = vmax.f32 %v1262, 0.0
        %v1413 = vmax.f32 %v1267, 0.0
        %v1414 = vmax.f32 %v1272, 0.0
        %v1415 = vmax.f32 %v1277, 0.0
        %v1416 = vmax.f32 %v1282, 0.0
        %v1417 = vmax.f32 %v1287, 0.0
        %v1418 = vmax.f32 %v1292, 0.0
        %v1419 = vmax.f32 %v1297, 0.0
        %v1420 = vmax.f32 %v1302, 0.0
        %v1421 = vmax.f32 %v1307, 0.0
        %v1422 = vmax.f32 %v1312, 0.0
        %v1423 = vmax.f32 %v1317, 0.0
        %v1424 = vmax.f32 %v1322, 0.0
        %v1425 = vmax.f32 %v1327, 0.0
        %v1426 = vmax.f32 %v1332, 0.0
        %v1427 = vmax.f32 %v1337, 0.0
        %v1428 = vmax.f32 %v1342, 0.0
        %v1429 = vmax.f32 %v1347, 0.0
        %v1430 = vmax.f32 %v1352, 0.0
        %v1431 = vmax.f32 %v1357, 0.0
        %v1432 = vmax.f32 %v1362, 0.0
        %v1433 = vmax.f32 %v1367, 0.0
        %v1434 = vmax.f32 %v1372, 0.0
        %v1435 = vmax.f32 %v1377, 0.0
        %v1436 = vmax.f32 %v1382, 0.0
        %v1437 = vmax.f32 %v1387, 0.0
        %v1438 = vmax.f32 %v1392, 0.0
        %v1439 = vmax.f32 %v1397, 0.0
        %v1440 = vmax.f32 %v1402, 0.0
        %v1441 = vmax.f32 %v1407, 0.0
        %v1442 = vld [vmem:[%s7] sm:$0x1]
        %v1443 = vld [vmem:[#allocation2] sm:$0x1]
        %1445 = vset.pattern.permute.xlu0 0
        %1446 = vperm.xlu0 %1445, %v1443
        %v1447 = vpop.permute.xlu0 %1446
        %v1449 = vlaneseq
        %v1450 = vshrl.u32 %v1449, 7
        %v1451 = vsub.s32 0, %v1450
        %v1452 = vrot.slane %v1447, %v1451
        %vm1453 = vcmask 261120
        %v1455 = vsel %vm1453, %v1442, 0
        %v1458 = vsel %vm1453, %v1410, 0
        %v1461 = vsel %vm1453, %v1411, 0
        %v1464 = vsel %vm1453, %v1412, 0
        %v1467 = vsel %vm1453, %v1413, 0
        %v1470 = vsel %vm1453, %v1414, 0
        %v1473 = vsel %vm1453, %v1415, 0
        %v1476 = vsel %vm1453, %v1416, 0
        %v1479 = vsel %vm1453, %v1417, 0
        %v1482 = vsel %vm1453, %v1418, 0
        %v1485 = vsel %vm1453, %v1419, 0
        %v1488 = vsel %vm1453, %v1420, 0
        %v1491 = vsel %vm1453, %v1421, 0
        %v1494 = vsel %vm1453, %v1422, 0
        %v1497 = vsel %vm1453, %v1423, 0
        %v1500 = vsel %vm1453, %v1424, 0
        %v1503 = vsel %vm1453, %v1425, 0
        %v1506 = vsel %vm1453, %v1426, 0
        %v1509 = vsel %vm1453, %v1427, 0
        %v1512 = vsel %vm1453, %v1428, 0
        %v1515 = vsel %vm1453, %v1429, 0
        %v1518 = vsel %vm1453, %v1430, 0
        %v1521 = vsel %vm1453, %v1431, 0
        %v1524 = vsel %vm1453, %v1432, 0
        %v1527 = vsel %vm1453, %v1433, 0
        %v1530 = vsel %vm1453, %v1434, 0
        %v1533 = vsel %vm1453, %v1435, 0
        %v1536 = vsel %vm1453, %v1436, 0
        %v1539 = vsel %vm1453, %v1437, 0
        %v1542 = vsel %vm1453, %v1438, 0
        %v1545 = vsel %vm1453, %v1439, 0
        %v1548 = vsel %vm1453, %v1440, 0
        %v1551 = vsel %vm1453, %v1441, 0
        %1553 = vmatprep.subr.mxu0 0.0
        %1554 = vmatpush1.xpose.msra.mxu0 %v1458
        %1555 = vmatprep.subr.mxu0 0.0
        %1556 = vmatpush1.xpose.msra.mxu0 %v1461
        %1557 = vmatprep.subr.mxu0 0.0
        %1558 = vmatpush1.xpose.msra.mxu0 %v1464
        %1559 = vmatprep.subr.mxu0 0.0
        %1560 = vmatpush1.xpose.msra.mxu0 %v1467
        %1561 = vmatprep.subr.mxu0 0.0
        %1562 = vmatpush1.xpose.msra.mxu0 %v1470
        %1563 = vmatprep.subr.mxu0 0.0
        %1564 = vmatpush1.xpose.msra.mxu0 %v1473
        %1565 = vmatprep.subr.mxu0 0.0
        %1566 = vmatpush1.xpose.msra.mxu0 %v1476
        %1567 = vmatprep.subr.mxu0 0.0
        %1568 = vmatpush1.xpose.msra.mxu0 %v1479
        %1569 = vmatprep.subr.mxu0 0.0
        %1570 = vmatpush1.xpose.msra.mxu0 %v1482
        %1571 = vmatprep.subr.mxu0 0.0
        %1572 = vmatpush1.xpose.msra.mxu0 %v1485
        %1573 = vmatprep.subr.mxu0 0.0
        %1574 = vmatpush1.xpose.msra.mxu0 %v1488
        %1575 = vmatprep.subr.mxu0 0.0
        %1576 = vmatpush1.xpose.msra.mxu0 %v1491
        %1577 = vmatprep.subr.mxu0 0.0
        %1578 = vmatpush1.xpose.msra.mxu0 %v1494
        %1579 = vmatprep.subr.mxu0 0.0
        %1580 = vmatpush1.xpose.msra.mxu0 %v1497
        %1581 = vmatprep.subr.mxu0 0.0
        %1582 = vmatpush1.xpose.msra.mxu0 %v1500
        %1583 = vmatprep.subr.mxu0 0.0
        %1584 = vmatpush1.xpose.msra.mxu0 %v1503
        %1585 = vmatprep.subr.mxu0 0.0
        %1586 = vmatpush1.xpose.msra.mxu0 %v1506
        %1587 = vmatprep.subr.mxu0 0.0
        %1588 = vmatpush1.xpose.msra.mxu0 %v1509
        %1589 = vmatprep.subr.mxu0 0.0
        %1590 = vmatpush1.xpose.msra.mxu0 %v1512
        %1591 = vmatprep.subr.mxu0 0.0
        %1592 = vmatpush1.xpose.msra.mxu0 %v1515
        %1593 = vmatprep.subr.mxu0 0.0
        %1594 = vmatpush1.xpose.msra.mxu0 %v1518
        %1595 = vmatprep.subr.mxu0 0.0
        %1596 = vmatpush1.xpose.msra.mxu0 %v1521
        %1597 = vmatprep.subr.mxu0 0.0
        %1598 = vmatpush1.xpose.msra.mxu0 %v1524
        %1599 = vmatprep.subr.mxu0 0.0
        %1600 = vmatpush1.xpose.msra.mxu0 %v1527
        %1601 = vmatprep.subr.mxu0 0.0
        %1602 = vmatpush1.xpose.msra.mxu0 %v1530
        %1603 = vmatprep.subr.mxu0 0.0
        %1604 = vmatpush1.xpose.msra.mxu0 %v1533
        %1605 = vmatprep.subr.mxu0 0.0
        %1606 = vmatpush1.xpose.msra.mxu0 %v1536
        %1607 = vmatprep.subr.mxu0 0.0
        %1608 = vmatpush1.xpose.msra.mxu0 %v1539
        %1609 = vmatprep.subr.mxu0 0.0
        %1610 = vmatpush1.xpose.msra.mxu0 %v1542
        %1611 = vmatprep.subr.mxu0 0.0
        %1612 = vmatpush1.xpose.msra.mxu0 %v1545
        %1613 = vmatprep.subr.mxu0 0.0
        %1614 = vmatpush1.xpose.msra.mxu0 %v1548
        %1615 = vmatprep.subr.mxu0 0.0
        %1616 = vmatpush1.xpose.msra.mxu0 %v1551
        %1617 = vmatprep.mubr.f32.mxu0 0.0
        %1618 = vmatmul.mubr.f32.gmra.mrb[0].mxu0 %v1455
        %v1619 = vpop.f32.mrb[0].mxu0
        %v1620 = vadd.f32 %v1452, %v1619
        %v1621 = vpop.f32.mrb[0].mxu0
        %v1622 = vadd.f32 %v1452, %v1621
        %1623 = vdwg.mxu0
        %v1624 = vsub.f32 0.0, %v1620
        %v1625 = vsub.f32 0.0, %v1622
        %v1626 = vmul.f32 %v1624, 1.442695
        %v1627 = vpow.pop %v1626
        %v1628 = vmul.f32 %v1625, 1.442695
        %v1629 = vpow.pop %v1628
        %v1630 = vadd.f32 %v1627, 1.0
        %v1631 = vadd.f32 %v1629, 1.0
        %v1632 = vrcp.pop %v1630
        %v1633 = vrcp.pop %v1631
        %v1636 = vcombine.low %v1632, %v1633
        %v1638 = vunpack.c.l.s4 1966171168
        %v1639 = vunpack.c.0.s8 %v1638
        %v1640 = vlaneseq
        %v1641 = vshrl.u32 %v1640, 7
        %v1642 = vsub.s32 %v1639, %v1641
        %v1643 = vrot.slane %v1636, %v1642
        %v1645 = vunpack.c.l.s4 1966171168
        %v1646 = vunpack.c.0.s8 %v1645
        %v1647 = vlaneseq
        %v1648 = vshrl.u32 %v1647, 7
        %v1649 = vsub.s32 %v1646, %v1648
        %v1650 = vrot.slane %v1643, %v1649
        %v1652 = vlaneseq
        %vm1653 = vcmp.ge.s32.totalorder %v1652, 0
        %vm1654 = vcmp.lt.s32.totalorder %v1652, 256
        %vm1655 = vmand %vm1653, %vm1654
        %1656 = vst.msk [vmem:[%s328] sm:$0x3] %vm1655, %v1650
        %s1657 = sand.u32 %s227, 1
        %s1658 = scalar_lea.sflag [#allocation4], %s1657
        %s1659 = sand.u32 %s227, 1
        %s1660 = smul.addr %s1659, 2
        %s1661 = scalar_lea.vmem [#allocation3], %s1660
        // Predicated region
        $region57: #{tpu_custom_call.1} parent=55 // pred_check
          %p1662 = pneg %p237
        $region58: #{tpu_custom_call.1} parent=55 // pred_check_branch
          %1664 = sbr.rel (%p1662) target = $region60
        $region59: #{tpu_custom_call.1} parent=55 // pred_region
          %s1665 = smul.u32 2, %s25
          %s1667 = ssub.s32 32, 32
          %1668 = vsyncadd %s1658, %s1667
          %s1669 = smul.addr %s1665, 16
          %s1670 = scalar_lea.hbm %s9, %s1669
          %s1672 = sshll.u32 %s1661, 4
          %s1673 = int_to_ptr.vmem [resolvable:$true] %s1672
          %1675 = dma.vmem_to_hbm [thread:$0]  %s1673, 32, %s1670, %s1658
        $region60: #{tpu_custom_call.1} parent=55 // pred_fallthru
          _
      $region56: #{tpu_custom_call.1} parent=5 // pred_fallthru
        _
      %p1676 = scmp.le.s32.totalorder 2, %s20
      // Predicated region
      $region61: #{tpu_custom_call.1} parent=5 // pred_check
        %p1677 = pneg %p1676
      $region62: #{tpu_custom_call.1} parent=5 // pred_check_branch
        %1679 = sbr.rel (%p1677) target = $region64
      $region63: #{tpu_custom_call.1} parent=5 // pred_region
        %s1680 = ssub.s32 %s20, 2
        // Predicated region
        $region65: #{tpu_custom_call.1} parent=63 // pred_check
          %p1681 = pneg %p243
        $region66: #{tpu_custom_call.1} parent=63 // pred_check_branch
          %1683 = sbr.rel (%p1681) target = $region68
        $region67: #{tpu_custom_call.1} parent=63 // pred_region
          %s1684 = sand.u32 %s228, 1
          %s1685 = scalar_lea.sflag [#allocation4], %s1684
          %s1686 = sand.u32 %s228, 1
          %s1687 = smul.addr %s1686, 2
          %s1688 = scalar_lea.vmem [#allocation3], %s1687
          %1689 = dma.done %s1685, 32
        $region68: #{tpu_custom_call.1} parent=63 // pred_fallthru
          _
      $region64: #{tpu_custom_call.1} parent=5 // pred_fallthru
        _
    $region6: #{tpu_custom_call.1} parent=1 // loop_footer
      %s24 = sadd.s32 1, %s20
    $region7: #{tpu_custom_call.1} parent=1 // loop_footer_branch
      %19 = sbr.rel target = $region3
    $region8: #{tpu_custom_call.1} parent=1 // loop_exit
      _
    %1690 = vsyncpa [#allocation4], 1
    %s1691 = scalar_lea.sflag [#allocation4], 1
    %1692 = vsyncpa %s1691, 1

</llo_original>
